<compile_context>
chip_gen: v6e
topology: v6e:2x2x1
jax: 0.10.0
libtpu: 0.0.40
codegen_flags: <defaults>
</compile_context>

<pallas_src>
import math

import jax
import jax.numpy as jnp
from jax import lax
from jax.experimental import pallas as pl
from jax.experimental.pallas import tpu as pltpu

_LN_EPS = 1e-5  # nn.LayerNorm default


def _layernorm(x, g, b):
    mu = jnp.mean(x, axis=-1, keepdims=True)
    var = jnp.mean((x - mu) * (x - mu), axis=-1, keepdims=True)
    return (x - mu) * lax.rsqrt(var + _LN_EPS) * g + b


# --------------------------------------------------------------------------- #
# Pass 1: LayerNorm1 + K/V projection, head-major bf16 output
# --------------------------------------------------------------------------- #
def _make_kv_kernel(E, H):
    HD = E // H

    def kernel(x_ref, g1_ref, b1_ref, wkv_ref, bkv_ref, k_ref, v_ref):
        # x_ref: (tkv, E) f32; wkv: (E, 2E) bf16; k_ref/v_ref: (H, tkv, HD) bf16.
        xn = _layernorm(x_ref[...], g1_ref[0], b1_ref[0]).astype(jnp.bfloat16)
        kv = jnp.dot(xn, wkv_ref[...],
                     preferred_element_type=jnp.float32) + bkv_ref[0]   # (tkv, 2E)
        for h in range(H):  # small static loop: just slices + stores
            k_ref[h] = kv[:, h * HD:(h + 1) * HD].astype(jnp.bfloat16)
            v_ref[h] = kv[:, E + h * HD:E + (h + 1) * HD].astype(jnp.bfloat16)

    return kernel


# --------------------------------------------------------------------------- #
# Pass 2: attention (per-head), merged output projection, LN2, chunked FFN
# --------------------------------------------------------------------------- #
def _make_attn_ffn_kernel(E, H, nC):
    HD = E // H

    def kernel(x_ref, k_ref, v_ref,
               g1_ref, b1_ref, wq_ref, bq_ref, wo_ref, bo_ref,
               g2_ref, b2_ref, w1_ref, bf1_ref, w2_ref, bf2_ref,
               o_ref, pv_hm_ref):
        x = x_ref[...]                                              # (ts, E) f32
        xn = _layernorm(x, g1_ref[0], b1_ref[0]).astype(jnp.bfloat16)

        # ---- per-head attention; dynamic loop bounds live state to one head ----
        @pl.loop(0, H)
        def _(h):
            # 1/sqrt(HD) is folded into wq/bq host-side.
            qh = (jnp.dot(xn, wq_ref[h], preferred_element_type=jnp.float32)
                  + bq_ref[h])                                      # (ts, HD) f32
            kh = k_ref[h]                                           # (S, HD) bf16
            vh = v_ref[h]                                           # (S, HD) bf16
            scores = lax.dot_general(qh.astype(jnp.bfloat16), kh,
                                     (((1,), (1,)), ((), ())),
                                     preferred_element_type=jnp.float32)  # (ts, S)
            m = jnp.max(scores, axis=-1, keepdims=True)
            e = jnp.exp(scores - m)
            p = e * pl.reciprocal(jnp.sum(e, axis=-1, keepdims=True), approx=True)
            pv = jnp.dot(p.astype(jnp.bfloat16), vh,
                         preferred_element_type=jnp.float32)        # (ts, HD)
            pv_hm_ref[h] = pv.astype(jnp.bfloat16)

        # ---- merged output projection: one K=E matmul instead of H K=HD ones ----
        pv_cat = jnp.concatenate([pv_hm_ref[h] for h in range(H)], axis=-1)  # (ts,E)
        attn = (jnp.dot(pv_cat, wo_ref[...], preferred_element_type=jnp.float32)
                + bo_ref[0])

        x1 = x + attn                                               # residual #1

        # ---- LayerNorm 2 + FFN chunked over the 4E hidden dim ----
        x2n = _layernorm(x1, g2_ref[0], b2_ref[0]).astype(jnp.bfloat16)

        def ffn_chunk(c, acc):
            h1 = (jnp.dot(x2n, w1_ref[c], preferred_element_type=jnp.float32)
                  + bf1_ref[c])                                     # (ts, C) f32
            # TODO(synk): nn.GELU() default is the exact erf GELU; tanh approx is
            # used for guaranteed Mosaic lowering (max abs diff ~3e-4).
            h1 = jax.nn.gelu(h1, approximate=True).astype(jnp.bfloat16)
            return acc + jnp.dot(h1, w2_ref[c], preferred_element_type=jnp.float32)

        # init carry = residual + output bias; dropouts are identity.
        o_ref[...] = lax.fori_loop(0, nC, ffn_chunk, x1 + bf2_ref[0])

    return kernel


# --------------------------------------------------------------------------- #
# Host-side parameter prep + pallas_call wrappers
# --------------------------------------------------------------------------- #
def _prepare_params(params, E, H):
    HD = E // H
    scale = 1.0 / math.sqrt(HD)
    wqkv, bqkv = params["wqkv"], params["bqkv"]

    # Q weights head-major (H, E, HD), scale folded; K/V kept packed (E, 2E).
    wq = (wqkv[:, :E] * scale).reshape(E, H, HD).transpose(1, 0, 2).astype(jnp.bfloat16)
    bq = (bqkv[:, :E] * scale).reshape(1, H, HD).transpose(1, 0, 2)       # (H,1,HD) f32
    wkv = wqkv[:, E:].astype(jnp.bfloat16)                                # (E, 2E)
    bkv = bqkv[:, E:]                                                     # (1, 2E) f32

    # FFN weights chunked along the 4E hidden dim (leading chunk axis).
    F = 4 * E
    C = 512 if (F > 512 and F % 512 == 0) else F
    nC = F // C
    w1 = params["w1"].reshape(E, nC, C).transpose(1, 0, 2).astype(jnp.bfloat16)  # (nC,E,C)
    bf1 = params["bf1"].reshape(1, nC, C).transpose(1, 0, 2)                     # (nC,1,C)
    w2 = params["w2"].reshape(nC, C, E).astype(jnp.bfloat16)                     # (nC,C,E)

    return dict(
        g1=params["g1"], b1=params["b1"],
        wq=wq, bq=bq, wkv=wkv, bkv=bkv,
        wo=params["wo"].astype(jnp.bfloat16), bo=params["bo"],
        g2=params["g2"], b2=params["b2"],
        w1=w1, bf1=bf1, w2=w2, bf2=params["bf2"],
        nC=nC,
    )


def _forward(x, p, H, ts, weight_buffer_count):
    B, S, E = x.shape
    HD = E // H
    nS = S // ts
    nC = p["nC"]

    def wspec(a):
        # Grid-invariant weight/bias block: whole array, constant index map.
        nd = a.ndim
        if weight_buffer_count is None:
            return pl.BlockSpec(a.shape, lambda *_: (0,) * nd)
        return pl.BlockSpec(a.shape, lambda *_: (0,) * nd,
                            pipeline_mode=pl.Buffered(weight_buffer_count))

    # ---------------- pass 1: K/V projection ----------------
    kv_weights = [p["g1"], p["b1"], p["wkv"], p["bkv"]]
    kv_out_spec = pl.BlockSpec((None, H, ts, HD), lambda b, s: (b, 0, s, 0))
    k_hm, v_hm = pl.pallas_call(
        _make_kv_kernel(E, H),
        out_shape=(jax.ShapeDtypeStruct((B, H, S, HD), jnp.bfloat16),
                   jax.ShapeDtypeStruct((B, H, S, HD), jnp.bfloat16)),
        grid_spec=pltpu.PrefetchScalarGridSpec(
            num_scalar_prefetch=0,
            grid=(B, nS),
            in_specs=[pl.BlockSpec((None, ts, E), lambda b, s: (b, s, 0))]
                     + [wspec(a) for a in kv_weights],
            out_specs=(kv_out_spec, kv_out_spec),
        ),
        compiler_params=pltpu.CompilerParams(
            dimension_semantics=("parallel", "parallel")),
    )(x, *kv_weights)

    # ---------------- pass 2: attention + FFN ----------------
    weights = [p["g1"], p["b1"], p["wq"], p["bq"], p["wo"], p["bo"],
               p["g2"], p["b2"], p["w1"], p["bf1"], p["w2"], p["bf2"]]
    kv_in_spec = pl.BlockSpec((None, H, S, HD), lambda b, s: (b, 0, 0, 0))
    out = pl.pallas_call(
        _make_attn_ffn_kernel(E, H, nC),
        out_shape=jax.ShapeDtypeStruct((B, S, E), jnp.float32),
        grid_spec=pltpu.PrefetchScalarGridSpec(
            num_scalar_prefetch=0,
            grid=(B, nS),
            in_specs=[pl.BlockSpec((None, ts, E), lambda b, s: (b, s, 0)),
                      kv_in_spec, kv_in_spec]
                     + [wspec(a) for a in weights],
            out_specs=pl.BlockSpec((None, ts, E), lambda b, s: (b, s, 0)),
            scratch_shapes=[pltpu.VMEM((H, ts, HD), jnp.bfloat16)],  # per-head p@V
        ),
        compiler_params=pltpu.CompilerParams(
            dimension_semantics=("parallel", "parallel"),
            vmem_limit_bytes=48 << 20),   # headroom below v7x's 64 MiB physical VMEM
    )(x, k_hm, v_hm, *weights)
    return out


def encoder_self_attention_block(x, params, num_heads, *, ts=None):
    """x: (B, S, E) f32. params: dict of pre-transposed (in, out) f32 weights."""
    B, S, E = x.shape
    H = num_heads
    assert E % H == 0
    if ts is None:
        ts = S if S <= 256 else 256   # query-row tile
    assert S % ts == 0 and (ts % 8 == 0 or ts == S)

    p = _prepare_params(params, E, H)
    try:
        return _forward(x, p, H, ts, weight_buffer_count=1)
    except Exception:
        # TODO(synk): pl.Buffered(1) (single-buffered grid-invariant weights) not
        # accepted by this jax/Mosaic build; fall back to default double buffering.
        return _forward(x, p, H, ts, weight_buffer_count=None)


# --------------------------------------------------------------------------- #
# Reference (pure JAX, f32) and test harness
# --------------------------------------------------------------------------- #
def _reference(x, params, H):
    B, S, E = x.shape
    HD = E // H

    def ln(v, g, b):
        mu = v.mean(-1, keepdims=True)
        var = ((v - mu) ** 2).mean(-1, keepdims=True)
        return (v - mu) / jnp.sqrt(var + _LN_EPS) * g + b

    xn = ln(x, params["g1"], params["b1"])
    qkv = xn @ params["wqkv"] + params["bqkv"]
    q, k, v = qkv[..., :E], qkv[..., E:2 * E], qkv[..., 2 * E:]
    q = q.reshape(B, S, H, HD).transpose(0, 2, 1, 3) / math.sqrt(HD)
    k = k.reshape(B, S, H, HD).transpose(0, 2, 1, 3)
    v = v.reshape(B, S, H, HD).transpose(0, 2, 1, 3)
    s = jnp.einsum("bhqd,bhkd->bhqk", q, k)
    pattn = jax.nn.softmax(s, axis=-1)
    o = jnp.einsum("bhqk,bhkd->bhqd", pattn, v).transpose(0, 2, 1, 3).reshape(B, S, E)
    attn = o @ params["wo"] + params["bo"]
    x1 = x + attn
    x2 = ln(x1, params["g2"], params["b2"])
    h1 = jax.nn.gelu(x2 @ params["w1"] + params["bf1"], approximate=True)
    return x1 + h1 @ params["w2"] + params["bf2"]


def init_params(key, E):
    """Deterministic synthetic parameters (shapes follow the PyTorch module)."""
    ks = jax.random.split(key, 6)
    std = 0.02
    # All linear weights stored as (in, out) = PyTorch weight transposed.
    return {
        "g1": jnp.ones((1, E), jnp.float32),
        "b1": jnp.zeros((1, E), jnp.float32),
        "wqkv": jax.random.normal(ks[0], (E, 3 * E), jnp.float32) * std,
        "bqkv": jax.random.normal(ks[1], (1, 3 * E), jnp.float32) * std,
        "wo": jax.random.normal(ks[2], (E, E), jnp.float32) * std,
        "bo": jnp.zeros((1, E), jnp.float32),
        "g2": jnp.ones((1, E), jnp.float32),
        "b2": jnp.zeros((1, E), jnp.float32),
        "w1": jax.random.normal(ks[3], (E, 4 * E), jnp.float32) * std,
        "bf1": jax.random.normal(ks[4], (1, 4 * E), jnp.float32) * std,
        "w2": jax.random.normal(ks[5], (4 * E, E), jnp.float32) * std,
        "bf2": jnp.zeros((1, E), jnp.float32),
    }


if __name__ == "__main__":
    # Small but layout-representative: head_dim = 128 (lane-aligned per-head tiles),
    # 4E = 1024 exercises the FFN chunk loop (two 512-wide chunks).
    B, S, E, H = 2, 16, 256, 2

    key = jax.random.PRNGKey(0)
    kx, kp = jax.random.split(key)
    x = jax.random.normal(kx, (B, S, E), jnp.float32)
    params = init_params(kp, E)

    out = jax.block_until_ready(encoder_self_attention_block(x, params, num_heads=H))
    ref = _reference(x, params, H)

    assert out.shape == (B, S, E) and out.dtype == jnp.float32
    assert bool(jnp.all(jnp.isfinite(out)))
    assert float(jnp.max(jnp.abs(out - ref))) < 3e-2
    print("KERNEL_OK")
</pallas_src>

<mosaic_0001>
module attributes {stable_mosaic.version = 11 : i64} {
  func.func @kernel(%arg0: i32, %arg1: i32, %arg2: memref<1x16x256xf32, #tpu.memory_space<vmem>>, %arg3: memref<1x256xf32, #tpu.memory_space<vmem>>, %arg4: memref<1x256xf32, #tpu.memory_space<vmem>>, %arg5: memref<256x512xbf16, #tpu.memory_space<vmem>>, %arg6: memref<1x512xf32, #tpu.memory_space<vmem>>, %arg7: memref<1x2x16x128xbf16, #tpu.memory_space<vmem>>, %arg8: memref<1x2x16x128xbf16, #tpu.memory_space<vmem>>) attributes {dimension_semantics = [#tpu.dimension_semantics<parallel>, #tpu.dimension_semantics<parallel>], iteration_bounds = array<i64: 2, 1>, scalar_prefetch = 0 : i64, scratch_operands = 0 : i64, tpu.core_type = #tpu.core_type<tc>, window_params = [{transform_indices = @transform_0, window_bounds = array<i64: 1, 16, 256>}, {pipeline_mode = #tpu.pipeline_mode<synchronous>, transform_indices = @transform_1, window_bounds = array<i64: 1, 256>}, {pipeline_mode = #tpu.pipeline_mode<synchronous>, transform_indices = @transform_2, window_bounds = array<i64: 1, 256>}, {pipeline_mode = #tpu.pipeline_mode<synchronous>, transform_indices = @transform_3, window_bounds = array<i64: 256, 512>}, {pipeline_mode = #tpu.pipeline_mode<synchronous>, transform_indices = @transform_4, window_bounds = array<i64: 1, 512>}, {transform_indices = @transform_5, window_bounds = array<i64: 1, 2, 16, 128>}, {transform_indices = @transform_6, window_bounds = array<i64: 1, 2, 16, 128>}]} {
    %c0 = arith.constant 0 : index
    %c0_0 = arith.constant 0 : index
    %c0_1 = arith.constant 0 : index
    %0 = vector.load %arg2[%c0, %c0_0, %c0_1] : memref<1x16x256xf32, #tpu.memory_space<vmem>>, vector<1x16x256xf32>
    %1 = vector.shape_cast %0 : vector<1x16x256xf32> to vector<16x256xf32>
    %c0_2 = arith.constant 0 : index
    %c0_3 = arith.constant 0 : index
    %2 = vector.load %arg3[%c0_2, %c0_3] : memref<1x256xf32, #tpu.memory_space<vmem>>, vector<1x256xf32>
    %3 = vector.shape_cast %2 : vector<1x256xf32> to vector<256xf32>
    %c0_4 = arith.constant 0 : index
    %c0_5 = arith.constant 0 : index
    %4 = vector.load %arg4[%c0_4, %c0_5] : memref<1x256xf32, #tpu.memory_space<vmem>>, vector<1x256xf32>
    %5 = vector.shape_cast %4 : vector<1x256xf32> to vector<256xf32>
    %cst = arith.constant dense<0.000000e+00> : vector<16xf32>
    %6 = vector.multi_reduction <add>, %1, %cst [1] : vector<16x256xf32> to vector<16xf32>
    %7 = vector.shape_cast %6 : vector<16xf32> to vector<16x1xf32>
    %cst_6 = arith.constant 2.560000e+02 : f32
    %8 = vector.broadcast %cst_6 : f32 to vector<16x1xf32>
    %9 = arith.divf %7, %8 : vector<16x1xf32>
    %10 = vector.broadcast %9 : vector<16x1xf32> to vector<16x256xf32>
    %11 = arith.subf %1, %10 : vector<16x256xf32>
    %12 = vector.broadcast %9 : vector<16x1xf32> to vector<16x256xf32>
    %13 = arith.subf %1, %12 : vector<16x256xf32>
    %14 = arith.mulf %11, %13 : vector<16x256xf32>
    %cst_7 = arith.constant dense<0.000000e+00> : vector<16xf32>
    %15 = vector.multi_reduction <add>, %14, %cst_7 [1] : vector<16x256xf32> to vector<16xf32>
    %16 = vector.shape_cast %15 : vector<16xf32> to vector<16x1xf32>
    %cst_8 = arith.constant 2.560000e+02 : f32
    %17 = vector.broadcast %cst_8 : f32 to vector<16x1xf32>
    %18 = arith.divf %16, %17 : vector<16x1xf32>
    %19 = vector.broadcast %9 : vector<16x1xf32> to vector<16x256xf32>
    %20 = arith.subf %1, %19 : vector<16x256xf32>
    %cst_9 = arith.constant 9.99999974E-6 : f32
    %21 = vector.broadcast %cst_9 : f32 to vector<16x1xf32>
    %22 = arith.addf %18, %21 : vector<16x1xf32>
    %23 = math.rsqrt %22 : vector<16x1xf32>
    %24 = vector.broadcast %23 : vector<16x1xf32> to vector<16x256xf32>
    %25 = arith.mulf %20, %24 : vector<16x256xf32>
    %26 = vector.shape_cast %3 : vector<256xf32> to vector<1x256xf32>
    %27 = vector.broadcast %26 : vector<1x256xf32> to vector<16x256xf32>
    %28 = arith.mulf %25, %27 : vector<16x256xf32>
    %29 = vector.shape_cast %5 : vector<256xf32> to vector<1x256xf32>
    %30 = vector.broadcast %29 : vector<1x256xf32> to vector<16x256xf32>
    %31 = arith.addf %28, %30 : vector<16x256xf32>
    %32 = arith.truncf %31 : vector<16x256xf32> to vector<16x256xbf16>
    %c0_10 = arith.constant 0 : index
    %c0_11 = arith.constant 0 : index
    %33 = vector.load %arg5[%c0_10, %c0_11] : memref<256x512xbf16, #tpu.memory_space<vmem>>, vector<256x512xbf16>
    %cst_12 = arith.constant dense<0.000000e+00> : vector<16x512xf32>
    %34 = tpu.matmul %32, %33, %cst_12 {dimension_numbers = #tpu.dot_dimension_numbers<[1], [0], [0], [1], [0, 0, 1, 1], [], []>} : vector<16x256xbf16>, vector<256x512xbf16>, vector<16x512xf32> -> vector<16x512xf32>
    %c0_13 = arith.constant 0 : index
    %c0_14 = arith.constant 0 : index
    %35 = vector.load %arg6[%c0_13, %c0_14] : memref<1x512xf32, #tpu.memory_space<vmem>>, vector<1x512xf32>
    %36 = vector.shape_cast %35 : vector<1x512xf32> to vector<512xf32>
    %37 = vector.shape_cast %36 : vector<512xf32> to vector<1x512xf32>
    %38 = vector.broadcast %37 : vector<1x512xf32> to vector<16x512xf32>
    %39 = arith.addf %34, %38 : vector<16x512xf32>
    %40 = vector.extract_strided_slice %39 {offsets = [0, 0], sizes = [16, 128], strides = [1, 1]} : vector<16x512xf32> to vector<16x128xf32>
    %41 = arith.truncf %40 : vector<16x128xf32> to vector<16x128xbf16>
    %c0_15 = arith.constant 0 : index
    %c0_16 = arith.constant 0 : index
    %c0_17 = arith.constant 0 : index
    %c0_18 = arith.constant 0 : index
    %42 = vector.load %arg7[%c0_15, %c0_16, %c0_17, %c0_18] : memref<1x2x16x128xbf16, #tpu.memory_space<vmem>>, vector<1x1x16x128xbf16>
    %43 = vector.shape_cast %42 : vector<1x1x16x128xbf16> to vector<16x128xbf16>
    %44 = vector.shape_cast %41 : vector<16x128xbf16> to vector<1x1x16x128xbf16>
    tpu.vector_store %arg7[%c0_15, %c0_16, %c0_17, %c0_18], %44 {strides = array<i32>} : memref<1x2x16x128xbf16, #tpu.memory_space<vmem>>, vector<1x1x16x128xbf16>,
    %45 = vector.extract_strided_slice %39 {offsets = [0, 256], sizes = [16, 128], strides = [1, 1]} : vector<16x512xf32> to vector<16x128xf32>
    %46 = arith.truncf %45 : vector<16x128xf32> to vector<16x128xbf16>
    %c0_19 = arith.constant 0 : index
    %c0_20 = arith.constant 0 : index
    %c0_21 = arith.constant 0 : index
    %c0_22 = arith.constant 0 : index
    %47 = vector.load %arg8[%c0_19, %c0_20, %c0_21, %c0_22] : memref<1x2x16x128xbf16, #tpu.memory_space<vmem>>, vector<1x1x16x128xbf16>
    %48 = vector.shape_cast %47 : vector<1x1x16x128xbf16> to vector<16x128xbf16>
    %49 = vector.shape_cast %46 : vector<16x128xbf16> to vector<1x1x16x128xbf16>
    tpu.vector_store %arg8[%c0_19, %c0_20, %c0_21, %c0_22], %49 {strides = array<i32>} : memref<1x2x16x128xbf16, #tpu.memory_space<vmem>>, vector<1x1x16x128xbf16>,
    %50 = vector.extract_strided_slice %39 {offsets = [0, 128], sizes = [16, 128], strides = [1, 1]} : vector<16x512xf32> to vector<16x128xf32>
    %51 = arith.truncf %50 : vector<16x128xf32> to vector<16x128xbf16>
    %c0_23 = arith.constant 0 : index
    %c1 = arith.constant 1 : index
    %c0_24 = arith.constant 0 : index
    %c0_25 = arith.constant 0 : index
    %52 = vector.load %arg7[%c0_23, %c1, %c0_24, %c0_25] : memref<1x2x16x128xbf16, #tpu.memory_space<vmem>>, vector<1x1x16x128xbf16>
    %53 = vector.shape_cast %52 : vector<1x1x16x128xbf16> to vector<16x128xbf16>
    %54 = vector.shape_cast %51 : vector<16x128xbf16> to vector<1x1x16x128xbf16>
    tpu.vector_store %arg7[%c0_23, %c1, %c0_24, %c0_25], %54 {strides = array<i32>} : memref<1x2x16x128xbf16, #tpu.memory_space<vmem>>, vector<1x1x16x128xbf16>,
    %55 = vector.extract_strided_slice %39 {offsets = [0, 384], sizes = [16, 128], strides = [1, 1]} : vector<16x512xf32> to vector<16x128xf32>
    %56 = arith.truncf %55 : vector<16x128xf32> to vector<16x128xbf16>
    %c0_26 = arith.constant 0 : index
    %c1_27 = arith.constant 1 : index
    %c0_28 = arith.constant 0 : index
    %c0_29 = arith.constant 0 : index
    %57 = vector.load %arg8[%c0_26, %c1_27, %c0_28, %c0_29] : memref<1x2x16x128xbf16, #tpu.memory_space<vmem>>, vector<1x1x16x128xbf16>
    %58 = vector.shape_cast %57 : vector<1x1x16x128xbf16> to vector<16x128xbf16>
    %59 = vector.shape_cast %56 : vector<16x128xbf16> to vector<1x1x16x128xbf16>
    tpu.vector_store %arg8[%c0_26, %c1_27, %c0_28, %c0_29], %59 {strides = array<i32>} : memref<1x2x16x128xbf16, #tpu.memory_space<vmem>>, vector<1x1x16x128xbf16>,
    return
  }
  func.func @transform_0(%arg0: i32, %arg1: i32) -> (i32, i32, i32) {
    %c0_i32 = arith.constant 0 : i32
    %c0_i32_0 = arith.constant 0 : i32
    return %arg0, %arg1, %c0_i32 : i32, i32, i32
  }
  func.func @transform_1(%arg0: i32, %arg1: i32) -> (i32, i32) {
    %c0_i32 = arith.constant 0 : i32
    %c0_i32_0 = arith.constant 0 : i32
    %c0_i32_1 = arith.constant 0 : i32
    return %c0_i32, %c0_i32_0 : i32, i32
  }
  func.func @transform_2(%arg0: i32, %arg1: i32) -> (i32, i32) {
    %c0_i32 = arith.constant 0 : i32
    %c0_i32_0 = arith.constant 0 : i32
    %c0_i32_1 = arith.constant 0 : i32
    return %c0_i32, %c0_i32_0 : i32, i32
  }
  func.func @transform_3(%arg0: i32, %arg1: i32) -> (i32, i32) {
    %c0_i32 = arith.constant 0 : i32
    %c0_i32_0 = arith.constant 0 : i32
    %c0_i32_1 = arith.constant 0 : i32
    return %c0_i32, %c0_i32_0 : i32, i32
  }
  func.func @transform_4(%arg0: i32, %arg1: i32) -> (i32, i32) {
    %c0_i32 = arith.constant 0 : i32
    %c0_i32_0 = arith.constant 0 : i32
    %c0_i32_1 = arith.constant 0 : i32
    return %c0_i32, %c0_i32_0 : i32, i32
  }
  func.func @transform_5(%arg0: i32, %arg1: i32) -> (i32, i32, i32, i32) {
    %c0_i32 = arith.constant 0 : i32
    %c0_i32_0 = arith.constant 0 : i32
    %c0_i32_1 = arith.constant 0 : i32
    return %arg0, %c0_i32, %arg1, %c0_i32_0 : i32, i32, i32, i32
  }
  func.func @transform_6(%arg0: i32, %arg1: i32) -> (i32, i32, i32, i32) {
    %c0_i32 = arith.constant 0 : i32
    %c0_i32_0 = arith.constant 0 : i32
    %c0_i32_1 = arith.constant 0 : i32
    return %arg0, %c0_i32, %arg1, %c0_i32_0 : i32, i32, i32, i32
  }
}

module attributes {stable_mosaic.version = 11 : i64} {
  func.func @kernel(%arg0: i32, %arg1: i32, %arg2: memref<1x16x256xf32, #tpu.memory_space<vmem>>, %arg3: memref<1x256xf32, #tpu.memory_space<vmem>>, %arg4: memref<1x256xf32, #tpu.memory_space<vmem>>, %arg5: memref<256x512xbf16, #tpu.memory_space<vmem>>, %arg6: memref<1x512xf32, #tpu.memory_space<vmem>>, %arg7: memref<1x2x16x128xbf16, #tpu.memory_space<vmem>>, %arg8: memref<1x2x16x128xbf16, #tpu.memory_space<vmem>>) attributes {dimension_semantics = [#tpu.dimension_semantics<parallel>, #tpu.dimension_semantics<parallel>], iteration_bounds = array<i64: 2, 1>, scalar_prefetch = 0 : i64, scratch_operands = 0 : i64, tpu.core_type = #tpu.core_type<tc>, window_params = [{transform_indices = @transform_0, window_bounds = array<i64: 1, 16, 256>}, {pipeline_mode = #tpu.pipeline_mode<synchronous>, transform_indices = @transform_1, window_bounds = array<i64: 1, 256>}, {pipeline_mode = #tpu.pipeline_mode<synchronous>, transform_indices = @transform_2, window_bounds = array<i64: 1, 256>}, {pipeline_mode = #tpu.pipeline_mode<synchronous>, transform_indices = @transform_3, window_bounds = array<i64: 256, 512>}, {pipeline_mode = #tpu.pipeline_mode<synchronous>, transform_indices = @transform_4, window_bounds = array<i64: 1, 512>}, {transform_indices = @transform_5, window_bounds = array<i64: 1, 2, 16, 128>}, {transform_indices = @transform_6, window_bounds = array<i64: 1, 2, 16, 128>}]} {
    %c0 = arith.constant 0 : index
    %c0_0 = arith.constant 0 : index
    %c0_1 = arith.constant 0 : index
    %0 = vector.load %arg2[%c0, %c0_0, %c0_1] : memref<1x16x256xf32, #tpu.memory_space<vmem>>, vector<1x16x256xf32>
    %1 = vector.shape_cast %0 : vector<1x16x256xf32> to vector<16x256xf32>
    %c0_2 = arith.constant 0 : index
    %c0_3 = arith.constant 0 : index
    %2 = vector.load %arg3[%c0_2, %c0_3] : memref<1x256xf32, #tpu.memory_space<vmem>>, vector<1x256xf32>
    %3 = vector.shape_cast %2 : vector<1x256xf32> to vector<256xf32>
    %c0_4 = arith.constant 0 : index
    %c0_5 = arith.constant 0 : index
    %4 = vector.load %arg4[%c0_4, %c0_5] : memref<1x256xf32, #tpu.memory_space<vmem>>, vector<1x256xf32>
    %5 = vector.shape_cast %4 : vector<1x256xf32> to vector<256xf32>
    %cst = arith.constant dense<0.000000e+00> : vector<16xf32>
    %6 = vector.multi_reduction <add>, %1, %cst [1] : vector<16x256xf32> to vector<16xf32>
    %7 = vector.shape_cast %6 : vector<16xf32> to vector<16x1xf32>
    %cst_6 = arith.constant 2.560000e+02 : f32
    %8 = vector.broadcast %cst_6 : f32 to vector<16x1xf32>
    %9 = arith.divf %7, %8 : vector<16x1xf32>
    %10 = vector.broadcast %9 : vector<16x1xf32> to vector<16x256xf32>
    %11 = arith.subf %1, %10 : vector<16x256xf32>
    %12 = vector.broadcast %9 : vector<16x1xf32> to vector<16x256xf32>
    %13 = arith.subf %1, %12 : vector<16x256xf32>
    %14 = arith.mulf %11, %13 : vector<16x256xf32>
    %cst_7 = arith.constant dense<0.000000e+00> : vector<16xf32>
    %15 = vector.multi_reduction <add>, %14, %cst_7 [1] : vector<16x256xf32> to vector<16xf32>
    %16 = vector.shape_cast %15 : vector<16xf32> to vector<16x1xf32>
    %cst_8 = arith.constant 2.560000e+02 : f32
    %17 = vector.broadcast %cst_8 : f32 to vector<16x1xf32>
    %18 = arith.divf %16, %17 : vector<16x1xf32>
    %19 = vector.broadcast %9 : vector<16x1xf32> to vector<16x256xf32>
    %20 = arith.subf %1, %19 : vector<16x256xf32>
    %cst_9 = arith.constant 9.99999974E-6 : f32
    %21 = vector.broadcast %cst_9 : f32 to vector<16x1xf32>
    %22 = arith.addf %18, %21 : vector<16x1xf32>
    %23 = math.rsqrt %22 : vector<16x1xf32>
    %24 = vector.broadcast %23 : vector<16x1xf32> to vector<16x256xf32>
    %25 = arith.mulf %20, %24 : vector<16x256xf32>
    %26 = vector.shape_cast %3 : vector<256xf32> to vector<1x256xf32>
    %27 = vector.broadcast %26 : vector<1x256xf32> to vector<16x256xf32>
    %28 = arith.mulf %25, %27 : vector<16x256xf32>
    %29 = vector.shape_cast %5 : vector<256xf32> to vector<1x256xf32>
    %30 = vector.broadcast %29 : vector<1x256xf32> to vector<16x256xf32>
    %31 = arith.addf %28, %30 : vector<16x256xf32>
    %32 = arith.truncf %31 : vector<16x256xf32> to vector<16x256xbf16>
    %c0_10 = arith.constant 0 : index
    %c0_11 = arith.constant 0 : index
    %33 = vector.load %arg5[%c0_10, %c0_11] : memref<256x512xbf16, #tpu.memory_space<vmem>>, vector<256x512xbf16>
    %cst_12 = arith.constant dense<0.000000e+00> : vector<16x512xf32>
    %34 = tpu.matmul %32, %33, %cst_12 {dimension_numbers = #tpu.dot_dimension_numbers<[1], [0], [0], [1], [0, 0, 1, 1], [], []>} : vector<16x256xbf16>, vector<256x512xbf16>, vector<16x512xf32> -> vector<16x512xf32>
    %c0_13 = arith.constant 0 : index
    %c0_14 = arith.constant 0 : index
    %35 = vector.load %arg6[%c0_13, %c0_14] : memref<1x512xf32, #tpu.memory_space<vmem>>, vector<1x512xf32>
    %36 = vector.shape_cast %35 : vector<1x512xf32> to vector<512xf32>
    %37 = vector.shape_cast %36 : vector<512xf32> to vector<1x512xf32>
    %38 = vector.broadcast %37 : vector<1x512xf32> to vector<16x512xf32>
    %39 = arith.addf %34, %38 : vector<16x512xf32>
    %40 = vector.extract_strided_slice %39 {offsets = [0, 0], sizes = [16, 128], strides = [1, 1]} : vector<16x512xf32> to vector<16x128xf32>
    %41 = arith.truncf %40 : vector<16x128xf32> to vector<16x128xbf16>
    %c0_15 = arith.constant 0 : index
    %c0_16 = arith.constant 0 : index
    %c0_17 = arith.constant 0 : index
    %c0_18 = arith.constant 0 : index
    %42 = vector.load %arg7[%c0_15, %c0_16, %c0_17, %c0_18] : memref<1x2x16x128xbf16, #tpu.memory_space<vmem>>, vector<1x1x16x128xbf16>
    %43 = vector.shape_cast %42 : vector<1x1x16x128xbf16> to vector<16x128xbf16>
    %44 = vector.shape_cast %41 : vector<16x128xbf16> to vector<1x1x16x128xbf16>
    tpu.vector_store %arg7[%c0_15, %c0_16, %c0_17, %c0_18], %44 {strides = array<i32>} : memref<1x2x16x128xbf16, #tpu.memory_space<vmem>>, vector<1x1x16x128xbf16>,
    %45 = vector.extract_strided_slice %39 {offsets = [0, 256], sizes = [16, 128], strides = [1, 1]} : vector<16x512xf32> to vector<16x128xf32>
    %46 = arith.truncf %45 : vector<16x128xf32> to vector<16x128xbf16>
    %c0_19 = arith.constant 0 : index
    %c0_20 = arith.constant 0 : index
    %c0_21 = arith.constant 0 : index
    %c0_22 = arith.constant 0 : index
    %47 = vector.load %arg8[%c0_19, %c0_20, %c0_21, %c0_22] : memref<1x2x16x128xbf16, #tpu.memory_space<vmem>>, vector<1x1x16x128xbf16>
    %48 = vector.shape_cast %47 : vector<1x1x16x128xbf16> to vector<16x128xbf16>
    %49 = vector.shape_cast %46 : vector<16x128xbf16> to vector<1x1x16x128xbf16>
    tpu.vector_store %arg8[%c0_19, %c0_20, %c0_21, %c0_22], %49 {strides = array<i32>} : memref<1x2x16x128xbf16, #tpu.memory_space<vmem>>, vector<1x1x16x128xbf16>,
    %50 = vector.extract_strided_slice %39 {offsets = [0, 128], sizes = [16, 128], strides = [1, 1]} : vector<16x512xf32> to vector<16x128xf32>
    %51 = arith.truncf %50 : vector<16x128xf32> to vector<16x128xbf16>
    %c0_23 = arith.constant 0 : index
    %c1 = arith.constant 1 : index
    %c0_24 = arith.constant 0 : index
    %c0_25 = arith.constant 0 : index
    %52 = vector.load %arg7[%c0_23, %c1, %c0_24, %c0_25] : memref<1x2x16x128xbf16, #tpu.memory_space<vmem>>, vector<1x1x16x128xbf16>
    %53 = vector.shape_cast %52 : vector<1x1x16x128xbf16> to vector<16x128xbf16>
    %54 = vector.shape_cast %51 : vector<16x128xbf16> to vector<1x1x16x128xbf16>
    tpu.vector_store %arg7[%c0_23, %c1, %c0_24, %c0_25], %54 {strides = array<i32>} : memref<1x2x16x128xbf16, #tpu.memory_space<vmem>>, vector<1x1x16x128xbf16>,
    %55 = vector.extract_strided_slice %39 {offsets = [0, 384], sizes = [16, 128], strides = [1, 1]} : vector<16x512xf32> to vector<16x128xf32>
    %56 = arith.truncf %55 : vector<16x128xf32> to vector<16x128xbf16>
    %c0_26 = arith.constant 0 : index
    %c1_27 = arith.constant 1 : index
    %c0_28 = arith.constant 0 : index
    %c0_29 = arith.constant 0 : index
    %57 = vector.load %arg8[%c0_26, %c1_27, %c0_28, %c0_29] : memref<1x2x16x128xbf16, #tpu.memory_space<vmem>>, vector<1x1x16x128xbf16>
    %58 = vector.shape_cast %57 : vector<1x1x16x128xbf16> to vector<16x128xbf16>
    %59 = vector.shape_cast %56 : vector<16x128xbf16> to vector<1x1x16x128xbf16>
    tpu.vector_store %arg8[%c0_26, %c1_27, %c0_28, %c0_29], %59 {strides = array<i32>} : memref<1x2x16x128xbf16, #tpu.memory_space<vmem>>, vector<1x1x16x128xbf16>,
    return
  }
  func.func @transform_0(%arg0: i32, %arg1: i32) -> (i32, i32, i32) {
    %c0_i32 = arith.constant 0 : i32
    %c0_i32_0 = arith.constant 0 : i32
    return %arg0, %arg1, %c0_i32 : i32, i32, i32
  }
  func.func @transform_1(%arg0: i32, %arg1: i32) -> (i32, i32) {
    %c0_i32 = arith.constant 0 : i32
    %c0_i32_0 = arith.constant 0 : i32
    %c0_i32_1 = arith.constant 0 : i32
    return %c0_i32, %c0_i32_0 : i32, i32
  }
  func.func @transform_2(%arg0: i32, %arg1: i32) -> (i32, i32) {
    %c0_i32 = arith.constant 0 : i32
    %c0_i32_0 = arith.constant 0 : i32
    %c0_i32_1 = arith.constant 0 : i32
    return %c0_i32, %c0_i32_0 : i32, i32
  }
  func.func @transform_3(%arg0: i32, %arg1: i32) -> (i32, i32) {
    %c0_i32 = arith.constant 0 : i32
    %c0_i32_0 = arith.constant 0 : i32
    %c0_i32_1 = arith.constant 0 : i32
    return %c0_i32, %c0_i32_0 : i32, i32
  }
  func.func @transform_4(%arg0: i32, %arg1: i32) -> (i32, i32) {
    %c0_i32 = arith.constant 0 : i32
    %c0_i32_0 = arith.constant 0 : i32
    %c0_i32_1 = arith.constant 0 : i32
    return %c0_i32, %c0_i32_0 : i32, i32
  }
  func.func @transform_5(%arg0: i32, %arg1: i32) -> (i32, i32, i32, i32) {
    %c0_i32 = arith.constant 0 : i32
    %c0_i32_0 = arith.constant 0 : i32
    %c0_i32_1 = arith.constant 0 : i32
    return %arg0, %c0_i32, %arg1, %c0_i32_0 : i32, i32, i32, i32
  }
  func.func @transform_6(%arg0: i32, %arg1: i32) -> (i32, i32, i32, i32) {
    %c0_i32 = arith.constant 0 : i32
    %c0_i32_0 = arith.constant 0 : i32
    %c0_i32_1 = arith.constant 0 : i32
    return %arg0, %c0_i32, %arg1, %c0_i32_0 : i32, i32, i32, i32
  }
}

</mosaic_0001>

<llo_original>
// kernel: tpu_custom_call.1
$region0: #{tpu_custom_call.1}
  #allocation0 [shape = 'u32[]', space=smem, size = 0x4, offset = 0x4, fixed_abs, tag = 'smem constant byte address 0x4 - core index']
  #allocation1 [shape = 'u32[144,128]{1,0:T(1,128)}', space=vmem, size = 0x12000, scoped, tag = 'internal scratch']
  %s0 = inlined_call_operand.hbm [shape: f32[2,16,256], index: 0, kind: input, shape index: {}]
  %s1 = inlined_call_operand.hbm [shape: f32[1,256], index: 1, kind: input, shape index: {}]
  %s2 = inlined_call_operand.vmem [shape: f32[1,256], index: 2, kind: input, shape index: {}]
  %s3 = inlined_call_operand.hbm [shape: bf16[256,512], index: 3, kind: input, shape index: {}]
  %s4 = inlined_call_operand.vmem [shape: f32[1,512], index: 4, kind: input, shape index: {}]
  %s5 = inlined_call_operand.hbm [shape: bf16[2,2,16,128], index: 5, kind: output, shape index: {0}]
  %s6 = inlined_call_operand.hbm [shape: bf16[2,2,16,128], index: 6, kind: output, shape index: {1}]
  %7 = xla_tuple %s5, %s6
  %s8 = sld [smem:[#allocation0]]
  $region73: #{tpu_custom_call.1} parent=0
    _
  %s10 = ssub.s32 1, %s8
  %s11 = scalar_select 0, %s10, %s8
  $region1: #{tpu_custom_call.1} parent=0
    #allocation2 [shape = 'u8[32768]{0}', space=vmem, size = 0x8000, scoped, tag = 'input window, operand 0']
    #allocation3 [shape = 's32[2]{0}', space=sflag, size = 0x8, scoped, tag = 'scoped memory for tpu_custom_call.1']
    #allocation4 [shape = 's32[2]{0}', space=sflag, size = 0x8, scoped, tag = 'scoped memory for tpu_custom_call.1']
    #allocation5 [shape = 'u8[1024]{0}', space=vmem, size = 0x400, scoped, tag = 'input window, operand 1, single buffered']
    #allocation6 [shape = 's32[1]{0}', space=sflag, size = 0x4, scoped, tag = 'scoped memory for tpu_custom_call.1']
    #allocation7 [shape = 'u8[262144]{0}', space=vmem, size = 0x40000, scoped, tag = 'input window, operand 3, single buffered']
    #allocation8 [shape = 'u8[16384]{0}', space=vmem, size = 0x4000, scoped, tag = 'output window, operand 0']
    #allocation9 [shape = 'u8[16384]{0}', space=vmem, size = 0x4000, scoped, tag = 'output window, operand 1']
    #allocation10 [shape = 's32[2]{0}', space=sflag, size = 0x8, scoped, tag = 'scoped memory for tpu_custom_call.1']
    %12 = vsyncpa [#allocation3], 0
    %s13 = scalar_lea.sflag [#allocation3], 1
    %14 = vsyncpa %s13, 0
    %15 = vsyncpa [#allocation6], 0
    %16 = vsyncpa [#allocation4], 0
    %s17 = scalar_lea.sflag [#allocation4], 1
    %18 = vsyncpa %s17, 0
    %19 = vsyncpa [#allocation10], 0
    %s20 = scalar_lea.sflag [#allocation10], 1
    %21 = vsyncpa %s20, 0
    loop: start=0, step=1, limit=4
    $region2: #{tpu_custom_call.1} parent=1 // loop_pre_header
      _
    $region3: #{tpu_custom_call.1} parent=1 // loop_header
      %s23 = sphi 0, %s27
      %p24 = scmp.ge.s32.totalorder %s23, 4
      %s30 = sphi 0, %s42
      %s31 = sphi 0, %s38
      %s32 = sphi 0, %s30
      %s33 = sphi 0, %s31
      %s34 = sphi 0, %s32
      %s35 = sphi 0, %s33
      %s47 = sphi 0, %s49
      %s50 = sphi 0, %s47
      %s51 = sphi 0, %s50
      %s67 = sphi 0, %s51
      %s71 = sphi 0, %s71
      %s73 = sphi 0, %s71
      %s74 = sphi 0, %s73
      %s88 = sphi 0, %s74
      %s92 = sphi 0, %s92
      %s94 = sphi 0, %s92
      %s95 = sphi 0, %s94
      %s109 = sphi 0, %s95
      %s113 = sphi 0, %s113
      %s115 = sphi 0, %s113
      %s116 = sphi 0, %s115
      %s130 = sphi 0, %s116
      %s134 = sphi 0, %s134
      %s136 = sphi 0, %s134
      %s137 = sphi 0, %s136
      %s151 = sphi 0, %s137
      %s159 = sphi 0, %s161
      %s162 = sphi 0, %s159
      %s163 = sphi 0, %s162
      %s179 = sphi 0, %s163
      %s187 = sphi 0, %s189
      %s190 = sphi 0, %s187
      %s191 = sphi 0, %s190
      %s207 = sphi 0, %s191
    $region4: #{tpu_custom_call.1} parent=1 // loop_header_branch
      %26 = sbr.rel (%p24) target = $region8
    $region5: #{tpu_custom_call.1} parent=1 // loop_body
      %s28 = ssub.s32 %s23, 1
      %s29 = ssub.s32 %s23, 2
      %s36 = sadd.s32 1, %s31
      %p37 = scmp.ge.s32.totalorder %s36, 1
      %s38 = scalar_select %p37, 0, %s36
      %s39 = sadd.s32 1, %s30
      %s40 = scalar_select %p37, %s39, %s30
      %p41 = scmp.ge.s32.totalorder %s40, 2
      %s42 = scalar_select %p41, 0, %s40
      %s43 = ssub.s32 %s30, %s42
      %s44 = ssub.s32 %s31, %s38
      %s45 = sor.u32 %s43, %s44
      %p46 = scmp.eq.s32.totalorder %s45, 0
      %s48 = sadd.s32 %s47, 1
      %s49 = scalar_select %p46, %s47, %s48
      %p52 = pneg %p46
      %p53 = scmp.eq.s32.totalorder %s23, 1
      %p54 = por %p52, %p53
      %p55 = scmp.ne.s32.totalorder %s47, %s50
      %p56 = scmp.eq.s32.totalorder %s23, 0
      %p57 = por %p55, %p56
      %p58 = scmp.ne.s32.totalorder %s47, %s50
      %p59 = scmp.eq.s32.totalorder %s28, 1
      %p60 = por %p58, %p59
      %p61 = scmp.ne.s32.totalorder %s50, %s51
      %p62 = scmp.eq.s32.totalorder %s28, 0
      %p63 = por %p61, %p62
      %p64 = scmp.ne.s32.totalorder %s50, %s51
      %p65 = scmp.eq.s32.totalorder %s29, 1
      %p66 = por %p64, %p65
      %p68 = scmp.ne.s32.totalorder %s51, %s67
      %p69 = scmp.eq.s32.totalorder %s29, 0
      %p70 = por %p68, %p69
      %s72 = sadd.s32 %s71, 1
      %p75 = scmp.eq.s32.totalorder %s23, 1
      %p76 = scmp.ne.s32.totalorder %s71, %s73
      %p77 = scmp.eq.s32.totalorder %s23, 0
      %p78 = por %p76, %p77
      %p79 = scmp.ne.s32.totalorder %s71, %s73
      %p80 = scmp.eq.s32.totalorder %s28, 1
      %p81 = por %p79, %p80
      %p82 = scmp.ne.s32.totalorder %s73, %s74
      %p83 = scmp.eq.s32.totalorder %s28, 0
      %p84 = por %p82, %p83
      %p85 = scmp.ne.s32.totalorder %s73, %s74
      %p86 = scmp.eq.s32.totalorder %s29, 1
      %p87 = por %p85, %p86
      %p89 = scmp.ne.s32.totalorder %s74, %s88
      %p90 = scmp.eq.s32.totalorder %s29, 0
      %p91 = por %p89, %p90
      %s93 = sadd.s32 %s92, 1
      %p96 = scmp.eq.s32.totalorder %s23, 1
      %p97 = scmp.ne.s32.totalorder %s92, %s94
      %p98 = scmp.eq.s32.totalorder %s23, 0
      %p99 = por %p97, %p98
      %p100 = scmp.ne.s32.totalorder %s92, %s94
      %p101 = scmp.eq.s32.totalorder %s28, 1
      %p102 = por %p100, %p101
      %p103 = scmp.ne.s32.totalorder %s94, %s95
      %p104 = scmp.eq.s32.totalorder %s28, 0
      %p105 = por %p103, %p104
      %p106 = scmp.ne.s32.totalorder %s94, %s95
      %p107 = scmp.eq.s32.totalorder %s29, 1
      %p108 = por %p106, %p107
      %p110 = scmp.ne.s32.totalorder %s95, %s109
      %p111 = scmp.eq.s32.totalorder %s29, 0
      %p112 = por %p110, %p111
      %s114 = sadd.s32 %s113, 1
      %p117 = scmp.eq.s32.totalorder %s23, 1
      %p118 = scmp.ne.s32.totalorder %s113, %s115
      %p119 = scmp.eq.s32.totalorder %s23, 0
      %p120 = por %p118, %p119
      %p121 = scmp.ne.s32.totalorder %s113, %s115
      %p122 = scmp.eq.s32.totalorder %s28, 1
      %p123 = por %p121, %p122
      %p124 = scmp.ne.s32.totalorder %s115, %s116
      %p125 = scmp.eq.s32.totalorder %s28, 0
      %p126 = por %p124, %p125
      %p127 = scmp.ne.s32.totalorder %s115, %s116
      %p128 = scmp.eq.s32.totalorder %s29, 1
      %p129 = por %p127, %p128
      %p131 = scmp.ne.s32.totalorder %s116, %s130
      %p132 = scmp.eq.s32.totalorder %s29, 0
      %p133 = por %p131, %p132
      %s135 = sadd.s32 %s134, 1
      %p138 = scmp.eq.s32.totalorder %s23, 1
      %p139 = scmp.ne.s32.totalorder %s134, %s136
      %p140 = scmp.eq.s32.totalorder %s23, 0
      %p141 = por %p139, %p140
      %p142 = scmp.ne.s32.totalorder %s134, %s136
      %p143 = scmp.eq.s32.totalorder %s28, 1
      %p144 = por %p142, %p143
      %p145 = scmp.ne.s32.totalorder %s136, %s137
      %p146 = scmp.eq.s32.totalorder %s28, 0
      %p147 = por %p145, %p146
      %p148 = scmp.ne.s32.totalorder %s136, %s137
      %p149 = scmp.eq.s32.totalorder %s29, 1
      %p150 = por %p148, %p149
      %p152 = scmp.ne.s32.totalorder %s137, %s151
      %p153 = scmp.eq.s32.totalorder %s29, 0
      %p154 = por %p152, %p153
      %s155 = ssub.s32 %s30, %s42
      %s156 = ssub.s32 %s31, %s38
      %s157 = sor.u32 %s155, %s156
      %p158 = scmp.eq.s32.totalorder %s157, 0
      %s160 = sadd.s32 %s159, 1
      %s161 = scalar_select %p158, %s159, %s160
      %p164 = pneg %p158
      %p165 = scmp.eq.s32.totalorder %s23, 1
      %p166 = por %p164, %p165
      %p167 = scmp.ne.s32.totalorder %s159, %s162
      %p168 = scmp.eq.s32.totalorder %s23, 0
      %p169 = por %p167, %p168
      %p170 = scmp.ne.s32.totalorder %s159, %s162
      %p171 = scmp.eq.s32.totalorder %s28, 1
      %p172 = por %p170, %p171
      %p173 = scmp.ne.s32.totalorder %s162, %s163
      %p174 = scmp.eq.s32.totalorder %s28, 0
      %p175 = por %p173, %p174
      %p176 = scmp.ne.s32.totalorder %s162, %s163
      %p177 = scmp.eq.s32.totalorder %s29, 1
      %p178 = por %p176, %p177
      %p180 = scmp.ne.s32.totalorder %s163, %s179
      %p181 = scmp.eq.s32.totalorder %s29, 0
      %p182 = por %p180, %p181
      %s183 = ssub.s32 %s30, %s42
      %s184 = ssub.s32 %s31, %s38
      %s185 = sor.u32 %s183, %s184
      %p186 = scmp.eq.s32.totalorder %s185, 0
      %s188 = sadd.s32 %s187, 1
      %s189 = scalar_select %p186, %s187, %s188
      %p192 = pneg %p186
      %p193 = scmp.eq.s32.totalorder %s23, 1
      %p194 = por %p192, %p193
      %p195 = scmp.ne.s32.totalorder %s187, %s190
      %p196 = scmp.eq.s32.totalorder %s23, 0
      %p197 = por %p195, %p196
      %p198 = scmp.ne.s32.totalorder %s187, %s190
      %p199 = scmp.eq.s32.totalorder %s28, 1
      %p200 = por %p198, %p199
      %p201 = scmp.ne.s32.totalorder %s190, %s191
      %p202 = scmp.eq.s32.totalorder %s28, 0
      %p203 = por %p201, %p202
      %p204 = scmp.ne.s32.totalorder %s190, %s191
      %p205 = scmp.eq.s32.totalorder %s29, 1
      %p206 = por %p204, %p205
      %p208 = scmp.ne.s32.totalorder %s191, %s207
      %p209 = scmp.eq.s32.totalorder %s29, 0
      %p210 = por %p208, %p209
      %p211 = scmp.le.s32.totalorder 1, %s23
      %p212 = scmp.lt.s32.totalorder %s23, 3
      %p213 = pnand %p211, %p212
      %p214 = pneg %p213
      // Predicated region
      $region9: #{tpu_custom_call.1} parent=5 // pred_check
        _
      $region10: #{tpu_custom_call.1} parent=5 // pred_check_branch
        %216 = sbr.rel (%p213) target = $region12
      $region11: #{tpu_custom_call.1} parent=5 // pred_region
        %s217 = ssub.s32 %s23, 1
        // Predicated region
        $region13: #{tpu_custom_call.1} parent=11 // pred_check
          %p218 = pneg %p84
        $region14: #{tpu_custom_call.1} parent=11 // pred_check_branch
          %220 = sbr.rel (%p218) target = $region16
        $region15: #{tpu_custom_call.1} parent=11 // pred_region
          %s222 = ssub.s32 32, 32
          %223 = vsyncadd [#allocation6], %s222
          %s225 = sshll.u32 [#allocation5], 4
          %s226 = int_to_ptr.vmem [resolvable:$true] %s225
          %228 = dma.hbm_to_vmem [thread:$0]  %s1, 32, %s226, [#allocation6]
        $region16: #{tpu_custom_call.1} parent=11 // pred_fallthru
          _
        // Predicated region
        $region17: #{tpu_custom_call.1} parent=11 // pred_check
          %p229 = pneg %p105
        $region18: #{tpu_custom_call.1} parent=11 // pred_check_branch
          %231 = sbr.rel (%p229) target = $region20
        $region19: #{tpu_custom_call.1} parent=11 // pred_region
          _
        $region20: #{tpu_custom_call.1} parent=11 // pred_fallthru
          _
        // Predicated region
        $region21: #{tpu_custom_call.1} parent=11 // pred_check
          %p232 = pneg %p126
        $region22: #{tpu_custom_call.1} parent=11 // pred_check_branch
          %234 = sbr.rel (%p232) target = $region24
        $region23: #{tpu_custom_call.1} parent=11 // pred_region
          %s236 = ssub.s32 8192, 8192
          %237 = vsyncadd [#allocation6], %s236
          %s238 = sshll.u32 [#allocation7], 4
          %s239 = int_to_ptr.vmem [resolvable:$true] %s238
          %244 = dma.hbm_to_vmem [thread:$0]  %s3, 8192, %s239, [#allocation6], 256, 256, 16
        $region24: #{tpu_custom_call.1} parent=11 // pred_fallthru
          _
        // Predicated region
        $region25: #{tpu_custom_call.1} parent=11 // pred_check
          %p245 = pneg %p147
        $region26: #{tpu_custom_call.1} parent=11 // pred_check_branch
          %247 = sbr.rel (%p245) target = $region28
        $region27: #{tpu_custom_call.1} parent=11 // pred_region
          _
        $region28: #{tpu_custom_call.1} parent=11 // pred_fallthru
          _
      $region12: #{tpu_custom_call.1} parent=5 // pred_fallthru
        _
      %p248 = scmp.lt.s32.totalorder %s23, 2
      // Predicated region
      $region29: #{tpu_custom_call.1} parent=5 // pred_check
        %p249 = pneg %p248
      $region30: #{tpu_custom_call.1} parent=5 // pred_check_branch
        %251 = sbr.rel (%p249) target = $region32
      $region31: #{tpu_custom_call.1} parent=5 // pred_region
        // Predicated region
        $region33: #{tpu_custom_call.1} parent=31 // pred_check
          %p252 = pneg %p57
        $region34: #{tpu_custom_call.1} parent=31 // pred_check_branch
          %254 = sbr.rel (%p252) target = $region36
        $region35: #{tpu_custom_call.1} parent=31 // pred_region
          %s255 = sand.u32 %s47, 1
          %s256 = scalar_lea.sflag [#allocation3], %s255
          %s257 = sand.u32 %s47, 1
          %s258 = smul.addr %s257, 32
          %s259 = scalar_lea.vmem [#allocation2], %s258
          %s260 = smul.u32 2, %s31
          %s262 = ssub.s32 512, 512
          %263 = vsyncadd %s256, %s262
          %s264 = smul.addr %s260, 2
          %s265 = smul.addr %s30, 4
          %s266 = sadd.s32 %s264, %s265
          %s267 = smul.addr %s266, 128
          %s268 = scalar_lea.hbm %s0, %s267
          %s269 = sshll.u32 %s259, 4
          %s270 = int_to_ptr.vmem [resolvable:$true] %s269
          %275 = dma.hbm_to_vmem [thread:$0]  %s268, 512, %s270, %s256, 256, 256, 16
        $region36: #{tpu_custom_call.1} parent=31 // pred_fallthru
          _
      $region32: #{tpu_custom_call.1} parent=5 // pred_fallthru
        _
      %p276 = scmp.le.s32.totalorder 1, %s23
      %p277 = scmp.lt.s32.totalorder %s23, 3
      %p278 = pnand %p276, %p277
      %p279 = pneg %p278
      // Predicated region
      $region37: #{tpu_custom_call.1} parent=5 // pred_check
        _
      $region38: #{tpu_custom_call.1} parent=5 // pred_check_branch
        %281 = sbr.rel (%p278) target = $region40
      $region39: #{tpu_custom_call.1} parent=5 // pred_region
        %s282 = ssub.s32 %s23, 1
        %s283 = sand.u32 %s50, 1
        %s284 = scalar_lea.sflag [#allocation3], %s283
        %s285 = sand.u32 %s50, 1
        %s286 = smul.addr %s285, 32
        %s287 = scalar_lea.vmem [#allocation2], %s286
        // Predicated region
        $region41: #{tpu_custom_call.1} parent=39 // pred_check
          %p288 = pneg %p63
        $region42: #{tpu_custom_call.1} parent=39 // pred_check_branch
          %290 = sbr.rel (%p288) target = $region44
        $region43: #{tpu_custom_call.1} parent=39 // pred_region
          %291 = dma.done %s284, 512
        $region44: #{tpu_custom_call.1} parent=39 // pred_fallthru
          _
        // Predicated region
        $region45: #{tpu_custom_call.1} parent=39 // pred_check
          %p292 = pneg %p84
        $region46: #{tpu_custom_call.1} parent=39 // pred_check_branch
          %294 = sbr.rel (%p292) target = $region48
        $region47: #{tpu_custom_call.1} parent=39 // pred_region
          %295 = dma.done [#allocation6], 32
        $region48: #{tpu_custom_call.1} parent=39 // pred_fallthru
          _
        // Predicated region
        $region49: #{tpu_custom_call.1} parent=39 // pred_check
          %p296 = pneg %p126
        $region50: #{tpu_custom_call.1} parent=39 // pred_check_branch
          %298 = sbr.rel (%p296) target = $region52
        $region51: #{tpu_custom_call.1} parent=39 // pred_region
          %299 = dma.done [#allocation6], 8192
        $region52: #{tpu_custom_call.1} parent=39 // pred_fallthru
          _
        %s300 = sand.u32 %s50, 1
        %s301 = scalar_lea.sflag [#allocation3], %s300
        %s302 = sand.u32 %s50, 1
        %s303 = smul.addr %s302, 32
        %s304 = scalar_lea.vmem [#allocation2], %s303
        %p305 = pneg %p63
        %p306 = pneg %p60
        %p307 = pneg %p84
        %p308 = pneg %p81
        %p309 = pneg %p105
        %p310 = pneg %p102
        %p311 = pneg %p126
        %p312 = pneg %p123
        %p313 = pneg %p147
        %p314 = pneg %p144
        %p315 = pneg %p175
        %p316 = pneg %p172
        %s317 = sand.u32 %s162, 1
        %s318 = scalar_lea.sflag [#allocation4], %s317
        %s319 = sand.u32 %s162, 1
        %s320 = smul.addr %s319, 16
        %s321 = scalar_lea.vmem [#allocation8], %s320
        %p322 = pneg %p203
        %p323 = pneg %p200
        %s324 = sand.u32 %s190, 1
        %s325 = scalar_lea.sflag [#allocation10], %s324
        %s326 = sand.u32 %s190, 1
        %s327 = smul.addr %s326, 16
        %s328 = scalar_lea.vmem [#allocation9], %s327
        %s329 = smul.u32 2, %s33
        %s330 = smul.u32 2, %s33
        %s331 = smul.u32 2, %s33
        %v332 = vld [vmem:[%s287] sm:$0xff]
        %v333 = vld [vmem:[%s287 + $0x8] sm:$0xff]
        %v334 = vld [vmem:[%s287 + $0x10] sm:$0xff]
        %v335 = vld [vmem:[%s287 + $0x18] sm:$0xff]
        %v336 = vld [vmem:[#allocation5] sm:$0x3]
        %v337 = vld [vmem:[%s2] sm:$0x3]
        %v338 = vadd.f32 %v332, %v333
        %339 = vadd.xlane.f32.xlu0 %v338
        %v340 = vpop.xlane.xlu0 %339
        %v341 = vadd.f32 %v334, %v335
        %342 = vadd.xlane.f32.xlu0 %v341
        %v343 = vpop.xlane.xlu0 %342
        %v344 = vrcp.pop 256.0
        %v345 = vmul.f32 %v340, %v344
        %v346 = vmul.f32 %v343, %v344
        %v347 = vsub.f32 %v332, %v345
        %v348 = vsub.f32 %v333, %v345
        %v349 = vsub.f32 %v334, %v346
        %v350 = vsub.f32 %v335, %v346
        %v351 = vmul.f32 %v347, %v347
        %v352 = vmul.f32 %v348, %v348
        %v353 = vmul.f32 %v349, %v349
        %v354 = vmul.f32 %v350, %v350
        %v355 = vadd.f32 %v351, %v352
        %356 = vadd.xlane.f32.xlu0 %v355
        %v357 = vpop.xlane.xlu0 %356
        %v358 = vadd.f32 %v353, %v354
        %359 = vadd.xlane.f32.xlu0 %v358
        %v360 = vpop.xlane.xlu0 %359
        %v361 = vmul.f32 %v357, %v344
        %v362 = vmul.f32 %v360, %v344
        %v363 = vadd.f32 %v361, 1e-05
        %v364 = vadd.f32 %v362, 1e-05
        %v365 = vrsqrt.pop %v363
        %v366 = vrsqrt.pop %v364
        %v367 = vmul.f32 %v347, %v365
        %v368 = vmul.f32 %v348, %v365
        %v369 = vmul.f32 %v349, %v366
        %v370 = vmul.f32 %v350, %v366
        %v372 = vlaneseq
        %v373 = vshrl.u32 %v372, 7
        %v374 = vsub.s32 0, %v373
        %v375 = vrot.slane %v336, %v374
        %v376 = vlaneseq
        %v377 = vshrl.u32 %v376, 7
        %v378 = vsub.s32 1, %v377
        %v379 = vrot.slane %v336, %v378
        %v382 = vmul.f32 %v367, %v375
        %v383 = vmul.f32 %v368, %v379
        %v384 = vmul.f32 %v369, %v375
        %v385 = vmul.f32 %v370, %v379
        %v387 = vlaneseq
        %v388 = vshrl.u32 %v387, 7
        %v389 = vsub.s32 0, %v388
        %v390 = vrot.slane %v337, %v389
        %v391 = vlaneseq
        %v392 = vshrl.u32 %v391, 7
        %v393 = vsub.s32 1, %v392
        %v394 = vrot.slane %v337, %v393
        %v397 = vadd.f32 %v382, %v390
        %v398 = vadd.f32 %v383, %v394
        %v399 = vadd.f32 %v384, %v390
        %v400 = vadd.f32 %v385, %v394
        %v401 = vpack.c.bf16 %v399, %v397
        %v402 = vpack.c.bf16 %v400, %v398
        %v403 = vld [vmem:[#allocation7] sm:$0xff]
        %v404 = vld [vmem:[#allocation7 + $0x8] sm:$0xff]
        %v405 = vld [vmem:[#allocation7 + $0x10] sm:$0xff]
        %v406 = vld [vmem:[#allocation7 + $0x18] sm:$0xff]
        %v407 = vld [vmem:[#allocation7 + $0x20] sm:$0xff]
        %v408 = vld [vmem:[#allocation7 + $0x28] sm:$0xff]
        %v409 = vld [vmem:[#allocation7 + $0x30] sm:$0xff]
        %v410 = vld [vmem:[#allocation7 + $0x38] sm:$0xff]
        %v411 = vld [vmem:[#allocation7 + $0x40] sm:$0xff]
        %v412 = vld [vmem:[#allocation7 + $0x48] sm:$0xff]
        %v413 = vld [vmem:[#allocation7 + $0x50] sm:$0xff]
        %v414 = vld [vmem:[#allocation7 + $0x58] sm:$0xff]
        %v415 = vld [vmem:[#allocation7 + $0x60] sm:$0xff]
        %v416 = vld [vmem:[#allocation7 + $0x68] sm:$0xff]
        %v417 = vld [vmem:[#allocation7 + $0x70] sm:$0xff]
        %v418 = vld [vmem:[#allocation7 + $0x78] sm:$0xff]
        %v419 = vld [vmem:[#allocation7 + $0x80] sm:$0xff]
        %v420 = vld [vmem:[#allocation7 + $0x88] sm:$0xff]
        %v421 = vld [vmem:[#allocation7 + $0x90] sm:$0xff]
        %v422 = vld [vmem:[#allocation7 + $0x98] sm:$0xff]
        %v423 = vld [vmem:[#allocation7 + $0xa0] sm:$0xff]
        %v424 = vld [vmem:[#allocation7 + $0xa8] sm:$0xff]
        %v425 = vld [vmem:[#allocation7 + $0xb0] sm:$0xff]
        %v426 = vld [vmem:[#allocation7 + $0xb8] sm:$0xff]
        %v427 = vld [vmem:[#allocation7 + $0xc0] sm:$0xff]
        %v428 = vld [vmem:[#allocation7 + $0xc8] sm:$0xff]
        %v429 = vld [vmem:[#allocation7 + $0xd0] sm:$0xff]
        %v430 = vld [vmem:[#allocation7 + $0xd8] sm:$0xff]
        %v431 = vld [vmem:[#allocation7 + $0xe0] sm:$0xff]
        %v432 = vld [vmem:[#allocation7 + $0xe8] sm:$0xff]
        %v433 = vld [vmem:[#allocation7 + $0xf0] sm:$0xff]
        %v434 = vld [vmem:[#allocation7 + $0xf8] sm:$0xff]
        %v435 = vld [vmem:[#allocation7 + $0x100] sm:$0xff]
        %v436 = vld [vmem:[#allocation7 + $0x108] sm:$0xff]
        %v437 = vld [vmem:[#allocation7 + $0x110] sm:$0xff]
        %v438 = vld [vmem:[#allocation7 + $0x118] sm:$0xff]
        %v439 = vld [vmem:[#allocation7 + $0x120] sm:$0xff]
        %v440 = vld [vmem:[#allocation7 + $0x128] sm:$0xff]
        %v441 = vld [vmem:[#allocation7 + $0x130] sm:$0xff]
        %v442 = vld [vmem:[#allocation7 + $0x138] sm:$0xff]
        %v443 = vld [vmem:[#allocation7 + $0x140] sm:$0xff]
        %v444 = vld [vmem:[#allocation7 + $0x148] sm:$0xff]
        %v445 = vld [vmem:[#allocation7 + $0x150] sm:$0xff]
        %v446 = vld [vmem:[#allocation7 + $0x158] sm:$0xff]
        %v447 = vld [vmem:[#allocation7 + $0x160] sm:$0xff]
        %v448 = vld [vmem:[#allocation7 + $0x168] sm:$0xff]
        %v449 = vld [vmem:[#allocation7 + $0x170] sm:$0xff]
        %v450 = vld [vmem:[#allocation7 + $0x178] sm:$0xff]
        %v451 = vld [vmem:[#allocation7 + $0x180] sm:$0xff]
        %v452 = vld [vmem:[#allocation7 + $0x188] sm:$0xff]
        %v453 = vld [vmem:[#allocation7 + $0x190] sm:$0xff]
        %v454 = vld [vmem:[#allocation7 + $0x198] sm:$0xff]
        %v455 = vld [vmem:[#allocation7 + $0x1a0] sm:$0xff]
        %v456 = vld [vmem:[#allocation7 + $0x1a8] sm:$0xff]
        %v457 = vld [vmem:[#allocation7 + $0x1b0] sm:$0xff]
        %v458 = vld [vmem:[#allocation7 + $0x1b8] sm:$0xff]
        %v459 = vld [vmem:[#allocation7 + $0x1c0] sm:$0xff]
        %v460 = vld [vmem:[#allocation7 + $0x1c8] sm:$0xff]
        %v461 = vld [vmem:[#allocation7 + $0x1d0] sm:$0xff]
        %v462 = vld [vmem:[#allocation7 + $0x1d8] sm:$0xff]
        %v463 = vld [vmem:[#allocation7 + $0x1e0] sm:$0xff]
        %v464 = vld [vmem:[#allocation7 + $0x1e8] sm:$0xff]
        %v465 = vld [vmem:[#allocation7 + $0x1f0] sm:$0xff]
        %v466 = vld [vmem:[#allocation7 + $0x1f8] sm:$0xff]
        %v467 = vld [vmem:[%s4] sm:$0xf]
        %v469 = vlaneseq
        %v470 = vshrl.u32 %v469, 7
        %v471 = vsub.s32 0, %v470
        %v472 = vrot.slane %v467, %v471
        %v473 = vlaneseq
        %v474 = vshrl.u32 %v473, 7
        %v475 = vsub.s32 1, %v474
        %v476 = vrot.slane %v467, %v475
        %v477 = vlaneseq
        %v478 = vshrl.u32 %v477, 7
        %v479 = vsub.s32 2, %v478
        %v480 = vrot.slane %v467, %v479
        %v481 = vlaneseq
        %v482 = vshrl.u32 %v481, 7
        %v483 = vsub.s32 3, %v482
        %v484 = vrot.slane %v467, %v483
        %v553 = vunpack.c.l.b16 %v403
        %v554 = vunpack.c.h.b16 %v403
        %v555 = vunpack.c.l.b16 %v404
        %v556 = vunpack.c.h.b16 %v404
        %v557 = vunpack.c.l.b16 %v405
        %v558 = vunpack.c.h.b16 %v405
        %v559 = vunpack.c.l.b16 %v406
        %v560 = vunpack.c.h.b16 %v406
        %v561 = vunpack.c.l.b16 %v407
        %v562 = vunpack.c.h.b16 %v407
        %v563 = vunpack.c.l.b16 %v408
        %v564 = vunpack.c.h.b16 %v408
        %v565 = vunpack.c.l.b16 %v409
        %v566 = vunpack.c.h.b16 %v409
        %v567 = vunpack.c.l.b16 %v410
        %v568 = vunpack.c.h.b16 %v410
        %v569 = vunpack.c.l.b16 %v411
        %v570 = vunpack.c.h.b16 %v411
        %v571 = vunpack.c.l.b16 %v412
        %v572 = vunpack.c.h.b16 %v412
        %v573 = vunpack.c.l.b16 %v413
        %v574 = vunpack.c.h.b16 %v413
        %v575 = vunpack.c.l.b16 %v414
        %v576 = vunpack.c.h.b16 %v414
        %v577 = vunpack.c.l.b16 %v415
        %v578 = vunpack.c.h.b16 %v415
        %v579 = vunpack.c.l.b16 %v416
        %v580 = vunpack.c.h.b16 %v416
        %v581 = vunpack.c.l.b16 %v417
        %v582 = vunpack.c.h.b16 %v417
        %v583 = vunpack.c.l.b16 %v418
        %v584 = vunpack.c.h.b16 %v418
        %v585 = vunpack.c.l.b16 %v419
        %v586 = vunpack.c.h.b16 %v419
        %v587 = vunpack.c.l.b16 %v420
        %v588 = vunpack.c.h.b16 %v420
        %v589 = vunpack.c.l.b16 %v421
        %v590 = vunpack.c.h.b16 %v421
        %v591 = vunpack.c.l.b16 %v422
        %v592 = vunpack.c.h.b16 %v422
        %v593 = vunpack.c.l.b16 %v423
        %v594 = vunpack.c.h.b16 %v423
        %v595 = vunpack.c.l.b16 %v424
        %v596 = vunpack.c.h.b16 %v424
        %v597 = vunpack.c.l.b16 %v425
        %v598 = vunpack.c.h.b16 %v425
        %v599 = vunpack.c.l.b16 %v426
        %v600 = vunpack.c.h.b16 %v426
        %v601 = vunpack.c.l.b16 %v427
        %v602 = vunpack.c.h.b16 %v427
        %v603 = vunpack.c.l.b16 %v428
        %v604 = vunpack.c.h.b16 %v428
        %v605 = vunpack.c.l.b16 %v429
        %v606 = vunpack.c.h.b16 %v429
        %v607 = vunpack.c.l.b16 %v430
        %v608 = vunpack.c.h.b16 %v430
        %v609 = vunpack.c.l.b16 %v431
        %v610 = vunpack.c.h.b16 %v431
        %v611 = vunpack.c.l.b16 %v432
        %v612 = vunpack.c.h.b16 %v432
        %v613 = vunpack.c.l.b16 %v433
        %v614 = vunpack.c.h.b16 %v433
        %v615 = vunpack.c.l.b16 %v434
        %v616 = vunpack.c.h.b16 %v434
        %v617 = vunpack.c.l.b16 %v435
        %v618 = vunpack.c.h.b16 %v435
        %v619 = vunpack.c.l.b16 %v436
        %v620 = vunpack.c.h.b16 %v436
        %v621 = vunpack.c.l.b16 %v437
        %v622 = vunpack.c.h.b16 %v437
        %v623 = vunpack.c.l.b16 %v438
        %v624 = vunpack.c.h.b16 %v438
        %v625 = vunpack.c.l.b16 %v439
        %v626 = vunpack.c.h.b16 %v439
        %v627 = vunpack.c.l.b16 %v440
        %v628 = vunpack.c.h.b16 %v440
        %v629 = vunpack.c.l.b16 %v441
        %v630 = vunpack.c.h.b16 %v441
        %v631 = vunpack.c.l.b16 %v442
        %v632 = vunpack.c.h.b16 %v442
        %v633 = vunpack.c.l.b16 %v443
        %v634 = vunpack.c.h.b16 %v443
        %v635 = vunpack.c.l.b16 %v444
        %v636 = vunpack.c.h.b16 %v444
        %v637 = vunpack.c.l.b16 %v445
        %v638 = vunpack.c.h.b16 %v445
        %v639 = vunpack.c.l.b16 %v446
        %v640 = vunpack.c.h.b16 %v446
        %v641 = vunpack.c.l.b16 %v447
        %v642 = vunpack.c.h.b16 %v447
        %v643 = vunpack.c.l.b16 %v448
        %v644 = vunpack.c.h.b16 %v448
        %v645 = vunpack.c.l.b16 %v449
        %v646 = vunpack.c.h.b16 %v449
        %v647 = vunpack.c.l.b16 %v450
        %v648 = vunpack.c.h.b16 %v450
        %v649 = vunpack.c.l.b16 %v451
        %v650 = vunpack.c.h.b16 %v451
        %v651 = vunpack.c.l.b16 %v452
        %v652 = vunpack.c.h.b16 %v452
        %v653 = vunpack.c.l.b16 %v453
        %v654 = vunpack.c.h.b16 %v453
        %v655 = vunpack.c.l.b16 %v454
        %v656 = vunpack.c.h.b16 %v454
        %v657 = vunpack.c.l.b16 %v455
        %v658 = vunpack.c.h.b16 %v455
        %v659 = vunpack.c.l.b16 %v456
        %v660 = vunpack.c.h.b16 %v456
        %v661 = vunpack.c.l.b16 %v457
        %v662 = vunpack.c.h.b16 %v457
        %v663 = vunpack.c.l.b16 %v458
        %v664 = vunpack.c.h.b16 %v458
        %v665 = vunpack.c.l.b16 %v459
        %v666 = vunpack.c.h.b16 %v459
        %v667 = vunpack.c.l.b16 %v460
        %v668 = vunpack.c.h.b16 %v460
        %v669 = vunpack.c.l.b16 %v461
        %v670 = vunpack.c.h.b16 %v461
        %v671 = vunpack.c.l.b16 %v462
        %v672 = vunpack.c.h.b16 %v462
        %v673 = vunpack.c.l.b16 %v463
        %v674 = vunpack.c.h.b16 %v463
        %v675 = vunpack.c.l.b16 %v464
        %v676 = vunpack.c.h.b16 %v464
        %v677 = vunpack.c.l.b16 %v465
        %v678 = vunpack.c.h.b16 %v465
        %v679 = vunpack.c.l.b16 %v466
        %v680 = vunpack.c.h.b16 %v466
        %v681 = vpack.c.b16 %v557, %v553
        %v682 = vpack.c.b16 %v558, %v554
        %v683 = vpack.c.b16 %v559, %v555
        %v684 = vpack.c.b16 %v560, %v556
        %v685 = vpack.c.b16 %v565, %v561
        %v686 = vpack.c.b16 %v566, %v562
        %v687 = vpack.c.b16 %v567, %v563
        %v688 = vpack.c.b16 %v568, %v564
        %v689 = vpack.c.b16 %v573, %v569
        %v690 = vpack.c.b16 %v574, %v570
        %v691 = vpack.c.b16 %v575, %v571
        %v692 = vpack.c.b16 %v576, %v572
        %v693 = vpack.c.b16 %v581, %v577
        %v694 = vpack.c.b16 %v582, %v578
        %v695 = vpack.c.b16 %v583, %v579
        %v696 = vpack.c.b16 %v584, %v580
        %v697 = vpack.c.b16 %v589, %v585
        %v698 = vpack.c.b16 %v590, %v586
        %v699 = vpack.c.b16 %v591, %v587
        %v700 = vpack.c.b16 %v592, %v588
        %v701 = vpack.c.b16 %v597, %v593
        %v702 = vpack.c.b16 %v598, %v594
        %v703 = vpack.c.b16 %v599, %v595
        %v704 = vpack.c.b16 %v600, %v596
        %v705 = vpack.c.b16 %v605, %v601
        %v706 = vpack.c.b16 %v606, %v602
        %v707 = vpack.c.b16 %v607, %v603
        %v708 = vpack.c.b16 %v608, %v604
        %v709 = vpack.c.b16 %v613, %v609
        %v710 = vpack.c.b16 %v614, %v610
        %v711 = vpack.c.b16 %v615, %v611
        %v712 = vpack.c.b16 %v616, %v612
        %v713 = vpack.c.b16 %v621, %v617
        %v714 = vpack.c.b16 %v622, %v618
        %v715 = vpack.c.b16 %v623, %v619
        %v716 = vpack.c.b16 %v624, %v620
        %v717 = vpack.c.b16 %v629, %v625
        %v718 = vpack.c.b16 %v630, %v626
        %v719 = vpack.c.b16 %v631, %v627
        %v720 = vpack.c.b16 %v632, %v628
        %v721 = vpack.c.b16 %v637, %v633
        %v722 = vpack.c.b16 %v638, %v634
        %v723 = vpack.c.b16 %v639, %v635
        %v724 = vpack.c.b16 %v640, %v636
        %v725 = vpack.c.b16 %v645, %v641
        %v726 = vpack.c.b16 %v646, %v642
        %v727 = vpack.c.b16 %v647, %v643
        %v728 = vpack.c.b16 %v648, %v644
        %v729 = vpack.c.b16 %v653, %v649
        %v730 = vpack.c.b16 %v654, %v650
        %v731 = vpack.c.b16 %v655, %v651
        %v732 = vpack.c.b16 %v656, %v652
        %v733 = vpack.c.b16 %v661, %v657
        %v734 = vpack.c.b16 %v662, %v658
        %v735 = vpack.c.b16 %v663, %v659
        %v736 = vpack.c.b16 %v664, %v660
        %v737 = vpack.c.b16 %v669, %v665
        %v738 = vpack.c.b16 %v670, %v666
        %v739 = vpack.c.b16 %v671, %v667
        %v740 = vpack.c.b16 %v672, %v668
        %v741 = vpack.c.b16 %v677, %v673
        %v742 = vpack.c.b16 %v678, %v674
        %v743 = vpack.c.b16 %v679, %v675
        %v744 = vpack.c.b16 %v680, %v676
        %809 = vmatprep.subr.bf16.mxu0 %v710
        %810 = vmatpush1.bf16.msra.mxu0 %v709
        %811 = vmatprep.subr.bf16.mxu0 %v706
        %812 = vmatpush1.bf16.msra.mxu0 %v705
        %813 = vmatprep.subr.bf16.mxu0 %v702
        %814 = vmatpush1.bf16.msra.mxu0 %v701
        %815 = vmatprep.subr.bf16.mxu0 %v698
        %816 = vmatpush1.bf16.msra.mxu0 %v697
        %817 = vmatprep.subr.bf16.mxu0 %v694
        %818 = vmatpush1.bf16.msra.mxu0 %v693
        %819 = vmatprep.subr.bf16.mxu0 %v690
        %820 = vmatpush1.bf16.msra.mxu0 %v689
        %821 = vmatprep.subr.bf16.mxu0 %v686
        %822 = vmatpush1.bf16.msra.mxu0 %v685
        %823 = vmatprep.subr.bf16.mxu0 %v682
        %824 = vmatpush1.bf16.msra.mxu0 %v681
        %825 = vmatprep.subr.bf16.mxu0 %v742
        %826 = vmatpush2.bf16.msra.mxu0 %v741
        %827 = vmatprep.subr.bf16.mxu0 %v738
        %828 = vmatpush2.bf16.msra.mxu0 %v737
        %829 = vmatprep.subr.bf16.mxu0 %v734
        %830 = vmatpush2.bf16.msra.mxu0 %v733
        %831 = vmatprep.subr.bf16.mxu0 %v730
        %832 = vmatpush2.bf16.msra.mxu0 %v729
        %833 = vmatprep.subr.bf16.mxu0 %v726
        %834 = vmatpush2.bf16.msra.mxu0 %v725
        %835 = vmatprep.subr.bf16.mxu0 %v722
        %836 = vmatpush2.bf16.msra.mxu0 %v721
        %837 = vmatprep.subr.bf16.mxu0 %v718
        %838 = vmatpush2.bf16.msra.mxu0 %v717
        %839 = vmatprep.subr.bf16.mxu0 %v714
        %840 = vmatpush2.bf16.msra.mxu0 %v713
        %841 = vmatprep.mubr.bf16.mxu0 %v402
        %842 = vmatmul.mubr.bf16.gmra.mxu0 %v401
        %v843 = vpop.f32.mrf.mxu0
        %v844 = vadd.f32 %v472, %v843
        %v845 = vpop.f32.mrf.mxu0
        %v846 = vadd.f32 %v476, %v845
        %v847 = vpop.f32.mrf.mxu0
        %v848 = vadd.f32 %v472, %v847
        %v849 = vpop.f32.mrf.mxu0
        %v850 = vadd.f32 %v476, %v849
        %851 = vdwg.mxu0
        %852 = vmatprep.subr.bf16.mxu0 %v712
        %853 = vmatpush1.bf16.msra.mxu0 %v711
        %854 = vmatprep.subr.bf16.mxu0 %v708
        %855 = vmatpush1.bf16.msra.mxu0 %v707
        %856 = vmatprep.subr.bf16.mxu0 %v704
        %857 = vmatpush1.bf16.msra.mxu0 %v703
        %858 = vmatprep.subr.bf16.mxu0 %v700
        %859 = vmatpush1.bf16.msra.mxu0 %v699
        %860 = vmatprep.subr.bf16.mxu0 %v696
        %861 = vmatpush1.bf16.msra.mxu0 %v695
        %862 = vmatprep.subr.bf16.mxu0 %v692
        %863 = vmatpush1.bf16.msra.mxu0 %v691
        %864 = vmatprep.subr.bf16.mxu0 %v688
        %865 = vmatpush1.bf16.msra.mxu0 %v687
        %866 = vmatprep.subr.bf16.mxu0 %v684
        %867 = vmatpush1.bf16.msra.mxu0 %v683
        %868 = vmatprep.subr.bf16.mxu0 %v744
        %869 = vmatpush2.bf16.msra.mxu0 %v743
        %870 = vmatprep.subr.bf16.mxu0 %v740
        %871 = vmatpush2.bf16.msra.mxu0 %v739
        %872 = vmatprep.subr.bf16.mxu0 %v736
        %873 = vmatpush2.bf16.msra.mxu0 %v735
        %874 = vmatprep.subr.bf16.mxu0 %v732
        %875 = vmatpush2.bf16.msra.mxu0 %v731
        %876 = vmatprep.subr.bf16.mxu0 %v728
        %877 = vmatpush2.bf16.msra.mxu0 %v727
        %878 = vmatprep.subr.bf16.mxu0 %v724
        %879 = vmatpush2.bf16.msra.mxu0 %v723
        %880 = vmatprep.subr.bf16.mxu0 %v720
        %881 = vmatpush2.bf16.msra.mxu0 %v719
        %882 = vmatprep.subr.bf16.mxu0 %v716
        %883 = vmatpush2.bf16.msra.mxu0 %v715
        %884 = vmatprep.mubr.bf16.mxu0 %v402
        %885 = vmatmul.mubr.bf16.gmra.mxu0 %v401
        %v886 = vpop.f32.mrf.mxu0
        %v887 = vadd.f32 %v480, %v886
        %v888 = vpop.f32.mrf.mxu0
        %v889 = vadd.f32 %v484, %v888
        %v890 = vpop.f32.mrf.mxu0
        %v891 = vadd.f32 %v480, %v890
        %v892 = vpop.f32.mrf.mxu0
        %v893 = vadd.f32 %v484, %v892
        %894 = vdwg.mxu0
        %v895 = vpack.c.bf16 %v848, %v844
        %v897 = vunpack.c.l.b16 %v895
        %v898 = vunpack.c.h.b16 %v895
        %v899 = vpack.c.b16 %v897, %v897
        %v900 = vpack.c.b16 %v898, %v898
        %903 = vst [vmem:[%s321] sm:$0xf] %v899
        %904 = vst [vmem:[%s321 + $0x4] sm:$0xf] %v900
        %v905 = vpack.c.bf16 %v891, %v887
        %v907 = vunpack.c.l.b16 %v905
        %v908 = vunpack.c.h.b16 %v905
        %v909 = vpack.c.b16 %v907, %v907
        %v910 = vpack.c.b16 %v908, %v908
        %913 = vst [vmem:[%s328] sm:$0xf] %v909
        %914 = vst [vmem:[%s328 + $0x4] sm:$0xf] %v910
        %v915 = vpack.c.bf16 %v850, %v846
        %v917 = vunpack.c.l.b16 %v915
        %v918 = vunpack.c.h.b16 %v915
        %v919 = vpack.c.b16 %v917, %v917
        %v920 = vpack.c.b16 %v918, %v918
        %s923 = scalar_lea.vmem %s321, 8 [#allocation8]
        %924 = vst [vmem:[%s923] sm:$0xf] %v919
        %925 = vst [vmem:[%s923 + $0x4] sm:$0xf] %v920
        %v926 = vpack.c.bf16 %v893, %v889
        %v928 = vunpack.c.l.b16 %v926
        %v929 = vunpack.c.h.b16 %v926
        %v930 = vpack.c.b16 %v928, %v928
        %v931 = vpack.c.b16 %v929, %v929
        %s934 = scalar_lea.vmem %s328, 8 [#allocation9]
        %935 = vst [vmem:[%s934] sm:$0xf] %v930
        %936 = vst [vmem:[%s934 + $0x4] sm:$0xf] %v931
        %s937 = sand.u32 %s162, 1
        %s938 = scalar_lea.sflag [#allocation4], %s937
        %s939 = sand.u32 %s162, 1
        %s940 = smul.addr %s939, 16
        %s941 = scalar_lea.vmem [#allocation8], %s940
        %s942 = sand.u32 %s190, 1
        %s943 = scalar_lea.sflag [#allocation10], %s942
        %s944 = sand.u32 %s190, 1
        %s945 = smul.addr %s944, 16
        %s946 = scalar_lea.vmem [#allocation9], %s945
        // Predicated region
        $region53: #{tpu_custom_call.1} parent=39 // pred_check
          %p947 = pneg %p172
        $region54: #{tpu_custom_call.1} parent=39 // pred_check_branch
          %949 = sbr.rel (%p947) target = $region56
        $region55: #{tpu_custom_call.1} parent=39 // pred_region
          %s950 = smul.u32 2, %s33
          %s952 = ssub.s32 256, 256
          %953 = vsyncadd %s938, %s952
          %s954 = smul.addr %s32, 4
          %s955 = sadd.s32 %s950, %s954
          %s956 = smul.addr %s955, 64
          %s957 = scalar_lea.hbm %s5, %s956
          %s958 = sshll.u32 %s941, 4
          %s959 = int_to_ptr.vmem [resolvable:$true] %s958
          %964 = dma.vmem_to_hbm [thread:$0]  %s959, 256, %s957, %s938, 64, 64, 4
        $region56: #{tpu_custom_call.1} parent=39 // pred_fallthru
          _
        // Predicated region
        $region57: #{tpu_custom_call.1} parent=39 // pred_check
          %p965 = pneg %p200
        $region58: #{tpu_custom_call.1} parent=39 // pred_check_branch
          %967 = sbr.rel (%p965) target = $region60
        $region59: #{tpu_custom_call.1} parent=39 // pred_region
          %s968 = smul.u32 2, %s33
          %s970 = ssub.s32 256, 256
          %971 = vsyncadd %s943, %s970
          %s972 = smul.addr %s32, 4
          %s973 = sadd.s32 %s968, %s972
          %s974 = smul.addr %s973, 64
          %s975 = scalar_lea.hbm %s6, %s974
          %s976 = sshll.u32 %s946, 4
          %s977 = int_to_ptr.vmem [resolvable:$true] %s976
          %982 = dma.vmem_to_hbm [thread:$0]  %s977, 256, %s975, %s943, 64, 64, 4
        $region60: #{tpu_custom_call.1} parent=39 // pred_fallthru
          _
      $region40: #{tpu_custom_call.1} parent=5 // pred_fallthru
        _
      %p983 = scmp.le.s32.totalorder 2, %s23
      // Predicated region
      $region61: #{tpu_custom_call.1} parent=5 // pred_check
        %p984 = pneg %p983
      $region62: #{tpu_custom_call.1} parent=5 // pred_check_branch
        %986 = sbr.rel (%p984) target = $region64
      $region63: #{tpu_custom_call.1} parent=5 // pred_region
        %s987 = ssub.s32 %s23, 2
        // Predicated region
        $region65: #{tpu_custom_call.1} parent=63 // pred_check
          %p988 = pneg %p178
        $region66: #{tpu_custom_call.1} parent=63 // pred_check_branch
          %990 = sbr.rel (%p988) target = $region68
        $region67: #{tpu_custom_call.1} parent=63 // pred_region
          %s991 = sand.u32 %s163, 1
          %s992 = scalar_lea.sflag [#allocation4], %s991
          %s993 = sand.u32 %s163, 1
          %s994 = smul.addr %s993, 16
          %s995 = scalar_lea.vmem [#allocation8], %s994
          %996 = dma.done %s992, 256
        $region68: #{tpu_custom_call.1} parent=63 // pred_fallthru
          _
        // Predicated region
        $region69: #{tpu_custom_call.1} parent=63 // pred_check
          %p997 = pneg %p206
        $region70: #{tpu_custom_call.1} parent=63 // pred_check_branch
          %999 = sbr.rel (%p997) target = $region72
        $region71: #{tpu_custom_call.1} parent=63 // pred_region
          %s1000 = sand.u32 %s191, 1
          %s1001 = scalar_lea.sflag [#allocation10], %s1000
          %s1002 = sand.u32 %s191, 1
          %s1003 = smul.addr %s1002, 16
          %s1004 = scalar_lea.vmem [#allocation9], %s1003
          %1005 = dma.done %s1001, 256
        $region72: #{tpu_custom_call.1} parent=63 // pred_fallthru
          _
      $region64: #{tpu_custom_call.1} parent=5 // pred_fallthru
        _
    $region6: #{tpu_custom_call.1} parent=1 // loop_footer
      %s27 = sadd.s32 1, %s23
    $region7: #{tpu_custom_call.1} parent=1 // loop_footer_branch
      %22 = sbr.rel target = $region3
    $region8: #{tpu_custom_call.1} parent=1 // loop_exit
      _
    %1006 = vsyncpa [#allocation3], 1
    %s1007 = scalar_lea.sflag [#allocation3], 1
    %1008 = vsyncpa %s1007, 1
    %1009 = vsyncpa [#allocation6], 1
    %1010 = vsyncpa [#allocation4], 1
    %s1011 = scalar_lea.sflag [#allocation4], 1
    %1012 = vsyncpa %s1011, 1
    %1013 = vsyncpa [#allocation10], 1
    %s1014 = scalar_lea.sflag [#allocation10], 1
    %1015 = vsyncpa %s1014, 1

// kernel: tpu_custom_call.1
$region0: #{tpu_custom_call.1}
  #allocation0 [shape = 'u32[]', space=smem, size = 0x4, offset = 0x4, fixed_abs, tag = 'smem constant byte address 0x4 - core index']
  #allocation1 [shape = 'u32[144,128]{1,0:T(1,128)}', space=vmem, size = 0x12000, scoped, tag = 'internal scratch']
  %s0 = inlined_call_operand.hbm [shape: f32[2,16,256], index: 0, kind: input, shape index: {}]
  %s1 = inlined_call_operand.hbm [shape: f32[1,256], index: 1, kind: input, shape index: {}]
  %s2 = inlined_call_operand.vmem [shape: f32[1,256], index: 2, kind: input, shape index: {}]
  %s3 = inlined_call_operand.hbm [shape: bf16[256,512], index: 3, kind: input, shape index: {}]
  %s4 = inlined_call_operand.vmem [shape: f32[1,512], index: 4, kind: input, shape index: {}]
  %s5 = inlined_call_operand.hbm [shape: bf16[2,2,16,128], index: 5, kind: output, shape index: {0}]
  %s6 = inlined_call_operand.hbm [shape: bf16[2,2,16,128], index: 6, kind: output, shape index: {1}]
  %7 = xla_tuple %s5, %s6
  %s8 = sld [smem:[#allocation0]]
  $region73: #{tpu_custom_call.1} parent=0
    _
  %s10 = ssub.s32 1, %s8
  %s11 = scalar_select 0, %s10, %s8
  $region1: #{tpu_custom_call.1} parent=0
    #allocation2 [shape = 'u8[32768]{0}', space=vmem, size = 0x8000, scoped, tag = 'input window, operand 0']
    #allocation3 [shape = 's32[2]{0}', space=sflag, size = 0x8, scoped, tag = 'scoped memory for tpu_custom_call.1']
    #allocation4 [shape = 's32[2]{0}', space=sflag, size = 0x8, scoped, tag = 'scoped memory for tpu_custom_call.1']
    #allocation5 [shape = 'u8[1024]{0}', space=vmem, size = 0x400, scoped, tag = 'input window, operand 1, single buffered']
    #allocation6 [shape = 's32[1]{0}', space=sflag, size = 0x4, scoped, tag = 'scoped memory for tpu_custom_call.1']
    #allocation7 [shape = 'u8[262144]{0}', space=vmem, size = 0x40000, scoped, tag = 'input window, operand 3, single buffered']
    #allocation8 [shape = 'u8[16384]{0}', space=vmem, size = 0x4000, scoped, tag = 'output window, operand 0']
    #allocation9 [shape = 'u8[16384]{0}', space=vmem, size = 0x4000, scoped, tag = 'output window, operand 1']
    #allocation10 [shape = 's32[2]{0}', space=sflag, size = 0x8, scoped, tag = 'scoped memory for tpu_custom_call.1']
    %12 = vsyncpa [#allocation3], 0
    %s13 = scalar_lea.sflag [#allocation3], 1
    %14 = vsyncpa %s13, 0
    %15 = vsyncpa [#allocation6], 0
    %16 = vsyncpa [#allocation4], 0
    %s17 = scalar_lea.sflag [#allocation4], 1
    %18 = vsyncpa %s17, 0
    %19 = vsyncpa [#allocation10], 0
    %s20 = scalar_lea.sflag [#allocation10], 1
    %21 = vsyncpa %s20, 0
    loop: start=0, step=1, limit=4
    $region2: #{tpu_custom_call.1} parent=1 // loop_pre_header
      _
    $region3: #{tpu_custom_call.1} parent=1 // loop_header
      %s23 = sphi 0, %s27
      %p24 = scmp.ge.s32.totalorder %s23, 4
      %s30 = sphi 0, %s42
      %s31 = sphi 0, %s38
      %s32 = sphi 0, %s30
      %s33 = sphi 0, %s31
      %s34 = sphi 0, %s32
      %s35 = sphi 0, %s33
      %s47 = sphi 0, %s49
      %s50 = sphi 0, %s47
      %s51 = sphi 0, %s50
      %s67 = sphi 0, %s51
      %s71 = sphi 0, %s71
      %s73 = sphi 0, %s71
      %s74 = sphi 0, %s73
      %s88 = sphi 0, %s74
      %s92 = sphi 0, %s92
      %s94 = sphi 0, %s92
      %s95 = sphi 0, %s94
      %s109 = sphi 0, %s95
      %s113 = sphi 0, %s113
      %s115 = sphi 0, %s113
      %s116 = sphi 0, %s115
      %s130 = sphi 0, %s116
      %s134 = sphi 0, %s134
      %s136 = sphi 0, %s134
      %s137 = sphi 0, %s136
      %s151 = sphi 0, %s137
      %s159 = sphi 0, %s161
      %s162 = sphi 0, %s159
      %s163 = sphi 0, %s162
      %s179 = sphi 0, %s163
      %s187 = sphi 0, %s189
      %s190 = sphi 0, %s187
      %s191 = sphi 0, %s190
      %s207 = sphi 0, %s191
    $region4: #{tpu_custom_call.1} parent=1 // loop_header_branch
      %26 = sbr.rel (%p24) target = $region8
    $region5: #{tpu_custom_call.1} parent=1 // loop_body
      %s28 = ssub.s32 %s23, 1
      %s29 = ssub.s32 %s23, 2
      %s36 = sadd.s32 1, %s31
      %p37 = scmp.ge.s32.totalorder %s36, 1
      %s38 = scalar_select %p37, 0, %s36
      %s39 = sadd.s32 1, %s30
      %s40 = scalar_select %p37, %s39, %s30
      %p41 = scmp.ge.s32.totalorder %s40, 2
      %s42 = scalar_select %p41, 0, %s40
      %s43 = ssub.s32 %s30, %s42
      %s44 = ssub.s32 %s31, %s38
      %s45 = sor.u32 %s43, %s44
      %p46 = scmp.eq.s32.totalorder %s45, 0
      %s48 = sadd.s32 %s47, 1
      %s49 = scalar_select %p46, %s47, %s48
      %p52 = pneg %p46
      %p53 = scmp.eq.s32.totalorder %s23, 1
      %p54 = por %p52, %p53
      %p55 = scmp.ne.s32.totalorder %s47, %s50
      %p56 = scmp.eq.s32.totalorder %s23, 0
      %p57 = por %p55, %p56
      %p58 = scmp.ne.s32.totalorder %s47, %s50
      %p59 = scmp.eq.s32.totalorder %s28, 1
      %p60 = por %p58, %p59
      %p61 = scmp.ne.s32.totalorder %s50, %s51
      %p62 = scmp.eq.s32.totalorder %s28, 0
      %p63 = por %p61, %p62
      %p64 = scmp.ne.s32.totalorder %s50, %s51
      %p65 = scmp.eq.s32.totalorder %s29, 1
      %p66 = por %p64, %p65
      %p68 = scmp.ne.s32.totalorder %s51, %s67
      %p69 = scmp.eq.s32.totalorder %s29, 0
      %p70 = por %p68, %p69
      %s72 = sadd.s32 %s71, 1
      %p75 = scmp.eq.s32.totalorder %s23, 1
      %p76 = scmp.ne.s32.totalorder %s71, %s73
      %p77 = scmp.eq.s32.totalorder %s23, 0
      %p78 = por %p76, %p77
      %p79 = scmp.ne.s32.totalorder %s71, %s73
      %p80 = scmp.eq.s32.totalorder %s28, 1
      %p81 = por %p79, %p80
      %p82 = scmp.ne.s32.totalorder %s73, %s74
      %p83 = scmp.eq.s32.totalorder %s28, 0
      %p84 = por %p82, %p83
      %p85 = scmp.ne.s32.totalorder %s73, %s74
      %p86 = scmp.eq.s32.totalorder %s29, 1
      %p87 = por %p85, %p86
      %p89 = scmp.ne.s32.totalorder %s74, %s88
      %p90 = scmp.eq.s32.totalorder %s29, 0
      %p91 = por %p89, %p90
      %s93 = sadd.s32 %s92, 1
      %p96 = scmp.eq.s32.totalorder %s23, 1
      %p97 = scmp.ne.s32.totalorder %s92, %s94
      %p98 = scmp.eq.s32.totalorder %s23, 0
      %p99 = por %p97, %p98
      %p100 = scmp.ne.s32.totalorder %s92, %s94
      %p101 = scmp.eq.s32.totalorder %s28, 1
      %p102 = por %p100, %p101
      %p103 = scmp.ne.s32.totalorder %s94, %s95
      %p104 = scmp.eq.s32.totalorder %s28, 0
      %p105 = por %p103, %p104
      %p106 = scmp.ne.s32.totalorder %s94, %s95
      %p107 = scmp.eq.s32.totalorder %s29, 1
      %p108 = por %p106, %p107
      %p110 = scmp.ne.s32.totalorder %s95, %s109
      %p111 = scmp.eq.s32.totalorder %s29, 0
      %p112 = por %p110, %p111
      %s114 = sadd.s32 %s113, 1
      %p117 = scmp.eq.s32.totalorder %s23, 1
      %p118 = scmp.ne.s32.totalorder %s113, %s115
      %p119 = scmp.eq.s32.totalorder %s23, 0
      %p120 = por %p118, %p119
      %p121 = scmp.ne.s32.totalorder %s113, %s115
      %p122 = scmp.eq.s32.totalorder %s28, 1
      %p123 = por %p121, %p122
      %p124 = scmp.ne.s32.totalorder %s115, %s116
      %p125 = scmp.eq.s32.totalorder %s28, 0
      %p126 = por %p124, %p125
      %p127 = scmp.ne.s32.totalorder %s115, %s116
      %p128 = scmp.eq.s32.totalorder %s29, 1
      %p129 = por %p127, %p128
      %p131 = scmp.ne.s32.totalorder %s116, %s130
      %p132 = scmp.eq.s32.totalorder %s29, 0
      %p133 = por %p131, %p132
      %s135 = sadd.s32 %s134, 1
      %p138 = scmp.eq.s32.totalorder %s23, 1
      %p139 = scmp.ne.s32.totalorder %s134, %s136
      %p140 = scmp.eq.s32.totalorder %s23, 0
      %p141 = por %p139, %p140
      %p142 = scmp.ne.s32.totalorder %s134, %s136
      %p143 = scmp.eq.s32.totalorder %s28, 1
      %p144 = por %p142, %p143
      %p145 = scmp.ne.s32.totalorder %s136, %s137
      %p146 = scmp.eq.s32.totalorder %s28, 0
      %p147 = por %p145, %p146
      %p148 = scmp.ne.s32.totalorder %s136, %s137
      %p149 = scmp.eq.s32.totalorder %s29, 1
      %p150 = por %p148, %p149
      %p152 = scmp.ne.s32.totalorder %s137, %s151
      %p153 = scmp.eq.s32.totalorder %s29, 0
      %p154 = por %p152, %p153
      %s155 = ssub.s32 %s30, %s42
      %s156 = ssub.s32 %s31, %s38
      %s157 = sor.u32 %s155, %s156
      %p158 = scmp.eq.s32.totalorder %s157, 0
      %s160 = sadd.s32 %s159, 1
      %s161 = scalar_select %p158, %s159, %s160
      %p164 = pneg %p158
      %p165 = scmp.eq.s32.totalorder %s23, 1
      %p166 = por %p164, %p165
      %p167 = scmp.ne.s32.totalorder %s159, %s162
      %p168 = scmp.eq.s32.totalorder %s23, 0
      %p169 = por %p167, %p168
      %p170 = scmp.ne.s32.totalorder %s159, %s162
      %p171 = scmp.eq.s32.totalorder %s28, 1
      %p172 = por %p170, %p171
      %p173 = scmp.ne.s32.totalorder %s162, %s163
      %p174 = scmp.eq.s32.totalorder %s28, 0
      %p175 = por %p173, %p174
      %p176 = scmp.ne.s32.totalorder %s162, %s163
      %p177 = scmp.eq.s32.totalorder %s29, 1
      %p178 = por %p176, %p177
      %p180 = scmp.ne.s32.totalorder %s163, %s179
      %p181 = scmp.eq.s32.totalorder %s29, 0
      %p182 = por %p180, %p181
      %s183 = ssub.s32 %s30, %s42
      %s184 = ssub.s32 %s31, %s38
      %s185 = sor.u32 %s183, %s184
      %p186 = scmp.eq.s32.totalorder %s185, 0
      %s188 = sadd.s32 %s187, 1
      %s189 = scalar_select %p186, %s187, %s188
      %p192 = pneg %p186
      %p193 = scmp.eq.s32.totalorder %s23, 1
      %p194 = por %p192, %p193
      %p195 = scmp.ne.s32.totalorder %s187, %s190
      %p196 = scmp.eq.s32.totalorder %s23, 0
      %p197 = por %p195, %p196
      %p198 = scmp.ne.s32.totalorder %s187, %s190
      %p199 = scmp.eq.s32.totalorder %s28, 1
      %p200 = por %p198, %p199
      %p201 = scmp.ne.s32.totalorder %s190, %s191
      %p202 = scmp.eq.s32.totalorder %s28, 0
      %p203 = por %p201, %p202
      %p204 = scmp.ne.s32.totalorder %s190, %s191
      %p205 = scmp.eq.s32.totalorder %s29, 1
      %p206 = por %p204, %p205
      %p208 = scmp.ne.s32.totalorder %s191, %s207
      %p209 = scmp.eq.s32.totalorder %s29, 0
      %p210 = por %p208, %p209
      %p211 = scmp.le.s32.totalorder 1, %s23
      %p212 = scmp.lt.s32.totalorder %s23, 3
      %p213 = pnand %p211, %p212
      %p214 = pneg %p213
      // Predicated region
      $region9: #{tpu_custom_call.1} parent=5 // pred_check
        _
      $region10: #{tpu_custom_call.1} parent=5 // pred_check_branch
        %216 = sbr.rel (%p213) target = $region12
      $region11: #{tpu_custom_call.1} parent=5 // pred_region
        %s217 = ssub.s32 %s23, 1
        // Predicated region
        $region13: #{tpu_custom_call.1} parent=11 // pred_check
          %p218 = pneg %p84
        $region14: #{tpu_custom_call.1} parent=11 // pred_check_branch
          %220 = sbr.rel (%p218) target = $region16
        $region15: #{tpu_custom_call.1} parent=11 // pred_region
          %s222 = ssub.s32 32, 32
          %223 = vsyncadd [#allocation6], %s222
          %s225 = sshll.u32 [#allocation5], 4
          %s226 = int_to_ptr.vmem [resolvable:$true] %s225
          %228 = dma.hbm_to_vmem [thread:$0]  %s1, 32, %s226, [#allocation6]
        $region16: #{tpu_custom_call.1} parent=11 // pred_fallthru
          _
        // Predicated region
        $region17: #{tpu_custom_call.1} parent=11 // pred_check
          %p229 = pneg %p105
        $region18: #{tpu_custom_call.1} parent=11 // pred_check_branch
          %231 = sbr.rel (%p229) target = $region20
        $region19: #{tpu_custom_call.1} parent=11 // pred_region
          _
        $region20: #{tpu_custom_call.1} parent=11 // pred_fallthru
          _
        // Predicated region
        $region21: #{tpu_custom_call.1} parent=11 // pred_check
          %p232 = pneg %p126
        $region22: #{tpu_custom_call.1} parent=11 // pred_check_branch
          %234 = sbr.rel (%p232) target = $region24
        $region23: #{tpu_custom_call.1} parent=11 // pred_region
          %s236 = ssub.s32 8192, 8192
          %237 = vsyncadd [#allocation6], %s236
          %s238 = sshll.u32 [#allocation7], 4
          %s239 = int_to_ptr.vmem [resolvable:$true] %s238
          %244 = dma.hbm_to_vmem [thread:$0]  %s3, 8192, %s239, [#allocation6], 256, 256, 16
        $region24: #{tpu_custom_call.1} parent=11 // pred_fallthru
          _
        // Predicated region
        $region25: #{tpu_custom_call.1} parent=11 // pred_check
          %p245 = pneg %p147
        $region26: #{tpu_custom_call.1} parent=11 // pred_check_branch
          %247 = sbr.rel (%p245) target = $region28
        $region27: #{tpu_custom_call.1} parent=11 // pred_region
          _
        $region28: #{tpu_custom_call.1} parent=11 // pred_fallthru
          _
      $region12: #{tpu_custom_call.1} parent=5 // pred_fallthru
        _
      %p248 = scmp.lt.s32.totalorder %s23, 2
      // Predicated region
      $region29: #{tpu_custom_call.1} parent=5 // pred_check
        %p249 = pneg %p248
      $region30: #{tpu_custom_call.1} parent=5 // pred_check_branch
        %251 = sbr.rel (%p249) target = $region32
      $region31: #{tpu_custom_call.1} parent=5 // pred_region
        // Predicated region
        $region33: #{tpu_custom_call.1} parent=31 // pred_check
          %p252 = pneg %p57
        $region34: #{tpu_custom_call.1} parent=31 // pred_check_branch
          %254 = sbr.rel (%p252) target = $region36
        $region35: #{tpu_custom_call.1} parent=31 // pred_region
          %s255 = sand.u32 %s47, 1
          %s256 = scalar_lea.sflag [#allocation3], %s255
          %s257 = sand.u32 %s47, 1
          %s258 = smul.addr %s257, 32
          %s259 = scalar_lea.vmem [#allocation2], %s258
          %s260 = smul.u32 2, %s31
          %s262 = ssub.s32 512, 512
          %263 = vsyncadd %s256, %s262
          %s264 = smul.addr %s260, 2
          %s265 = smul.addr %s30, 4
          %s266 = sadd.s32 %s264, %s265
          %s267 = smul.addr %s266, 128
          %s268 = scalar_lea.hbm %s0, %s267
          %s269 = sshll.u32 %s259, 4
          %s270 = int_to_ptr.vmem [resolvable:$true] %s269
          %275 = dma.hbm_to_vmem [thread:$0]  %s268, 512, %s270, %s256, 256, 256, 16
        $region36: #{tpu_custom_call.1} parent=31 // pred_fallthru
          _
      $region32: #{tpu_custom_call.1} parent=5 // pred_fallthru
        _
      %p276 = scmp.le.s32.totalorder 1, %s23
      %p277 = scmp.lt.s32.totalorder %s23, 3
      %p278 = pnand %p276, %p277
      %p279 = pneg %p278
      // Predicated region
      $region37: #{tpu_custom_call.1} parent=5 // pred_check
        _
      $region38: #{tpu_custom_call.1} parent=5 // pred_check_branch
        %281 = sbr.rel (%p278) target = $region40
      $region39: #{tpu_custom_call.1} parent=5 // pred_region
        %s282 = ssub.s32 %s23, 1
        %s283 = sand.u32 %s50, 1
        %s284 = scalar_lea.sflag [#allocation3], %s283
        %s285 = sand.u32 %s50, 1
        %s286 = smul.addr %s285, 32
        %s287 = scalar_lea.vmem [#allocation2], %s286
        // Predicated region
        $region41: #{tpu_custom_call.1} parent=39 // pred_check
          %p288 = pneg %p63
        $region42: #{tpu_custom_call.1} parent=39 // pred_check_branch
          %290 = sbr.rel (%p288) target = $region44
        $region43: #{tpu_custom_call.1} parent=39 // pred_region
          %291 = dma.done %s284, 512
        $region44: #{tpu_custom_call.1} parent=39 // pred_fallthru
          _
        // Predicated region
        $region45: #{tpu_custom_call.1} parent=39 // pred_check
          %p292 = pneg %p84
        $region46: #{tpu_custom_call.1} parent=39 // pred_check_branch
          %294 = sbr.rel (%p292) target = $region48
        $region47: #{tpu_custom_call.1} parent=39 // pred_region
          %295 = dma.done [#allocation6], 32
        $region48: #{tpu_custom_call.1} parent=39 // pred_fallthru
          _
        // Predicated region
        $region49: #{tpu_custom_call.1} parent=39 // pred_check
          %p296 = pneg %p126
        $region50: #{tpu_custom_call.1} parent=39 // pred_check_branch
          %298 = sbr.rel (%p296) target = $region52
        $region51: #{tpu_custom_call.1} parent=39 // pred_region
          %299 = dma.done [#allocation6], 8192
        $region52: #{tpu_custom_call.1} parent=39 // pred_fallthru
          _
        %s300 = sand.u32 %s50, 1
        %s301 = scalar_lea.sflag [#allocation3], %s300
        %s302 = sand.u32 %s50, 1
        %s303 = smul.addr %s302, 32
        %s304 = scalar_lea.vmem [#allocation2], %s303
        %p305 = pneg %p63
        %p306 = pneg %p60
        %p307 = pneg %p84
        %p308 = pneg %p81
        %p309 = pneg %p105
        %p310 = pneg %p102
        %p311 = pneg %p126
        %p312 = pneg %p123
        %p313 = pneg %p147
        %p314 = pneg %p144
        %p315 = pneg %p175
        %p316 = pneg %p172
        %s317 = sand.u32 %s162, 1
        %s318 = scalar_lea.sflag [#allocation4], %s317
        %s319 = sand.u32 %s162, 1
        %s320 = smul.addr %s319, 16
        %s321 = scalar_lea.vmem [#allocation8], %s320
        %p322 = pneg %p203
        %p323 = pneg %p200
        %s324 = sand.u32 %s190, 1
        %s325 = scalar_lea.sflag [#allocation10], %s324
        %s326 = sand.u32 %s190, 1
        %s327 = smul.addr %s326, 16
        %s328 = scalar_lea.vmem [#allocation9], %s327
        %s329 = smul.u32 2, %s33
        %s330 = smul.u32 2, %s33
        %s331 = smul.u32 2, %s33
        %v332 = vld [vmem:[%s287] sm:$0xff]
        %v333 = vld [vmem:[%s287 + $0x8] sm:$0xff]
        %v334 = vld [vmem:[%s287 + $0x10] sm:$0xff]
        %v335 = vld [vmem:[%s287 + $0x18] sm:$0xff]
        %v336 = vld [vmem:[#allocation5] sm:$0x3]
        %v337 = vld [vmem:[%s2] sm:$0x3]
        %v338 = vadd.f32 %v332, %v333
        %339 = vadd.xlane.f32.xlu0 %v338
        %v340 = vpop.xlane.xlu0 %339
        %v341 = vadd.f32 %v334, %v335
        %342 = vadd.xlane.f32.xlu0 %v341
        %v343 = vpop.xlane.xlu0 %342
        %v344 = vrcp.pop 256.0
        %v345 = vmul.f32 %v340, %v344
        %v346 = vmul.f32 %v343, %v344
        %v347 = vsub.f32 %v332, %v345
        %v348 = vsub.f32 %v333, %v345
        %v349 = vsub.f32 %v334, %v346
        %v350 = vsub.f32 %v335, %v346
        %v351 = vmul.f32 %v347, %v347
        %v352 = vmul.f32 %v348, %v348
        %v353 = vmul.f32 %v349, %v349
        %v354 = vmul.f32 %v350, %v350
        %v355 = vadd.f32 %v351, %v352
        %356 = vadd.xlane.f32.xlu0 %v355
        %v357 = vpop.xlane.xlu0 %356
        %v358 = vadd.f32 %v353, %v354
        %359 = vadd.xlane.f32.xlu0 %v358
        %v360 = vpop.xlane.xlu0 %359
        %v361 = vmul.f32 %v357, %v344
        %v362 = vmul.f32 %v360, %v344
        %v363 = vadd.f32 %v361, 1e-05
        %v364 = vadd.f32 %v362, 1e-05
        %v365 = vrsqrt.pop %v363
        %v366 = vrsqrt.pop %v364
        %v367 = vmul.f32 %v347, %v365
        %v368 = vmul.f32 %v348, %v365
        %v369 = vmul.f32 %v349, %v366
        %v370 = vmul.f32 %v350, %v366
        %v372 = vlaneseq
        %v373 = vshrl.u32 %v372, 7
        %v374 = vsub.s32 0, %v373
        %v375 = vrot.slane %v336, %v374
        %v376 = vlaneseq
        %v377 = vshrl.u32 %v376, 7
        %v378 = vsub.s32 1, %v377
        %v379 = vrot.slane %v336, %v378
        %v382 = vmul.f32 %v367, %v375
        %v383 = vmul.f32 %v368, %v379
        %v384 = vmul.f32 %v369, %v375
        %v385 = vmul.f32 %v370, %v379
        %v387 = vlaneseq
        %v388 = vshrl.u32 %v387, 7
        %v389 = vsub.s32 0, %v388
        %v390 = vrot.slane %v337, %v389
        %v391 = vlaneseq
        %v392 = vshrl.u32 %v391, 7
        %v393 = vsub.s32 1, %v392
        %v394 = vrot.slane %v337, %v393
        %v397 = vadd.f32 %v382, %v390
        %v398 = vadd.f32 %v383, %v394
        %v399 = vadd.f32 %v384, %v390
        %v400 = vadd.f32 %v385, %v394
        %v401 = vpack.c.bf16 %v399, %v397
        %v402 = vpack.c.bf16 %v400, %v398
        %v403 = vld [vmem:[#allocation7] sm:$0xff]
        %v404 = vld [vmem:[#allocation7 + $0x8] sm:$0xff]
        %v405 = vld [vmem:[#allocation7 + $0x10] sm:$0xff]
        %v406 = vld [vmem:[#allocation7 + $0x18] sm:$0xff]
        %v407 = vld [vmem:[#allocation7 + $0x20] sm:$0xff]
        %v408 = vld [vmem:[#allocation7 + $0x28] sm:$0xff]
        %v409 = vld [vmem:[#allocation7 + $0x30] sm:$0xff]
        %v410 = vld [vmem:[#allocation7 + $0x38] sm:$0xff]
        %v411 = vld [vmem:[#allocation7 + $0x40] sm:$0xff]
        %v412 = vld [vmem:[#allocation7 + $0x48] sm:$0xff]
        %v413 = vld [vmem:[#allocation7 + $0x50] sm:$0xff]
        %v414 = vld [vmem:[#allocation7 + $0x58] sm:$0xff]
        %v415 = vld [vmem:[#allocation7 + $0x60] sm:$0xff]
        %v416 = vld [vmem:[#allocation7 + $0x68] sm:$0xff]
        %v417 = vld [vmem:[#allocation7 + $0x70] sm:$0xff]
        %v418 = vld [vmem:[#allocation7 + $0x78] sm:$0xff]
        %v419 = vld [vmem:[#allocation7 + $0x80] sm:$0xff]
        %v420 = vld [vmem:[#allocation7 + $0x88] sm:$0xff]
        %v421 = vld [vmem:[#allocation7 + $0x90] sm:$0xff]
        %v422 = vld [vmem:[#allocation7 + $0x98] sm:$0xff]
        %v423 = vld [vmem:[#allocation7 + $0xa0] sm:$0xff]
        %v424 = vld [vmem:[#allocation7 + $0xa8] sm:$0xff]
        %v425 = vld [vmem:[#allocation7 + $0xb0] sm:$0xff]
        %v426 = vld [vmem:[#allocation7 + $0xb8] sm:$0xff]
        %v427 = vld [vmem:[#allocation7 + $0xc0] sm:$0xff]
        %v428 = vld [vmem:[#allocation7 + $0xc8] sm:$0xff]
        %v429 = vld [vmem:[#allocation7 + $0xd0] sm:$0xff]
        %v430 = vld [vmem:[#allocation7 + $0xd8] sm:$0xff]
        %v431 = vld [vmem:[#allocation7 + $0xe0] sm:$0xff]
        %v432 = vld [vmem:[#allocation7 + $0xe8] sm:$0xff]
        %v433 = vld [vmem:[#allocation7 + $0xf0] sm:$0xff]
        %v434 = vld [vmem:[#allocation7 + $0xf8] sm:$0xff]
        %v435 = vld [vmem:[#allocation7 + $0x100] sm:$0xff]
        %v436 = vld [vmem:[#allocation7 + $0x108] sm:$0xff]
        %v437 = vld [vmem:[#allocation7 + $0x110] sm:$0xff]
        %v438 = vld [vmem:[#allocation7 + $0x118] sm:$0xff]
        %v439 = vld [vmem:[#allocation7 + $0x120] sm:$0xff]
        %v440 = vld [vmem:[#allocation7 + $0x128] sm:$0xff]
        %v441 = vld [vmem:[#allocation7 + $0x130] sm:$0xff]
        %v442 = vld [vmem:[#allocation7 + $0x138] sm:$0xff]
        %v443 = vld [vmem:[#allocation7 + $0x140] sm:$0xff]
        %v444 = vld [vmem:[#allocation7 + $0x148] sm:$0xff]
        %v445 = vld [vmem:[#allocation7 + $0x150] sm:$0xff]
        %v446 = vld [vmem:[#allocation7 + $0x158] sm:$0xff]
        %v447 = vld [vmem:[#allocation7 + $0x160] sm:$0xff]
        %v448 = vld [vmem:[#allocation7 + $0x168] sm:$0xff]
        %v449 = vld [vmem:[#allocation7 + $0x170] sm:$0xff]
        %v450 = vld [vmem:[#allocation7 + $0x178] sm:$0xff]
        %v451 = vld [vmem:[#allocation7 + $0x180] sm:$0xff]
        %v452 = vld [vmem:[#allocation7 + $0x188] sm:$0xff]
        %v453 = vld [vmem:[#allocation7 + $0x190] sm:$0xff]
        %v454 = vld [vmem:[#allocation7 + $0x198] sm:$0xff]
        %v455 = vld [vmem:[#allocation7 + $0x1a0] sm:$0xff]
        %v456 = vld [vmem:[#allocation7 + $0x1a8] sm:$0xff]
        %v457 = vld [vmem:[#allocation7 + $0x1b0] sm:$0xff]
        %v458 = vld [vmem:[#allocation7 + $0x1b8] sm:$0xff]
        %v459 = vld [vmem:[#allocation7 + $0x1c0] sm:$0xff]
        %v460 = vld [vmem:[#allocation7 + $0x1c8] sm:$0xff]
        %v461 = vld [vmem:[#allocation7 + $0x1d0] sm:$0xff]
        %v462 = vld [vmem:[#allocation7 + $0x1d8] sm:$0xff]
        %v463 = vld [vmem:[#allocation7 + $0x1e0] sm:$0xff]
        %v464 = vld [vmem:[#allocation7 + $0x1e8] sm:$0xff]
        %v465 = vld [vmem:[#allocation7 + $0x1f0] sm:$0xff]
        %v466 = vld [vmem:[#allocation7 + $0x1f8] sm:$0xff]
        %v467 = vld [vmem:[%s4] sm:$0xf]
        %v469 = vlaneseq
        %v470 = vshrl.u32 %v469, 7
        %v471 = vsub.s32 0, %v470
        %v472 = vrot.slane %v467, %v471
        %v473 = vlaneseq
        %v474 = vshrl.u32 %v473, 7
        %v475 = vsub.s32 1, %v474
        %v476 = vrot.slane %v467, %v475
        %v477 = vlaneseq
        %v478 = vshrl.u32 %v477, 7
        %v479 = vsub.s32 2, %v478
        %v480 = vrot.slane %v467, %v479
        %v481 = vlaneseq
        %v482 = vshrl.u32 %v481, 7
        %v483 = vsub.s32 3, %v482
        %v484 = vrot.slane %v467, %v483
        %v553 = vunpack.c.l.b16 %v403
        %v554 = vunpack.c.h.b16 %v403
        %v555 = vunpack.c.l.b16 %v404
        %v556 = vunpack.c.h.b16 %v404
        %v557 = vunpack.c.l.b16 %v405
        %v558 = vunpack.c.h.b16 %v405
        %v559 = vunpack.c.l.b16 %v406
        %v560 = vunpack.c.h.b16 %v406
        %v561 = vunpack.c.l.b16 %v407
        %v562 = vunpack.c.h.b16 %v407
        %v563 = vunpack.c.l.b16 %v408
        %v564 = vunpack.c.h.b16 %v408
        %v565 = vunpack.c.l.b16 %v409
        %v566 = vunpack.c.h.b16 %v409
        %v567 = vunpack.c.l.b16 %v410
        %v568 = vunpack.c.h.b16 %v410
        %v569 = vunpack.c.l.b16 %v411
        %v570 = vunpack.c.h.b16 %v411
        %v571 = vunpack.c.l.b16 %v412
        %v572 = vunpack.c.h.b16 %v412
        %v573 = vunpack.c.l.b16 %v413
        %v574 = vunpack.c.h.b16 %v413
        %v575 = vunpack.c.l.b16 %v414
        %v576 = vunpack.c.h.b16 %v414
        %v577 = vunpack.c.l.b16 %v415
        %v578 = vunpack.c.h.b16 %v415
        %v579 = vunpack.c.l.b16 %v416
        %v580 = vunpack.c.h.b16 %v416
        %v581 = vunpack.c.l.b16 %v417
        %v582 = vunpack.c.h.b16 %v417
        %v583 = vunpack.c.l.b16 %v418
        %v584 = vunpack.c.h.b16 %v418
        %v585 = vunpack.c.l.b16 %v419
        %v586 = vunpack.c.h.b16 %v419
        %v587 = vunpack.c.l.b16 %v420
        %v588 = vunpack.c.h.b16 %v420
        %v589 = vunpack.c.l.b16 %v421
        %v590 = vunpack.c.h.b16 %v421
        %v591 = vunpack.c.l.b16 %v422
        %v592 = vunpack.c.h.b16 %v422
        %v593 = vunpack.c.l.b16 %v423
        %v594 = vunpack.c.h.b16 %v423
        %v595 = vunpack.c.l.b16 %v424
        %v596 = vunpack.c.h.b16 %v424
        %v597 = vunpack.c.l.b16 %v425
        %v598 = vunpack.c.h.b16 %v425
        %v599 = vunpack.c.l.b16 %v426
        %v600 = vunpack.c.h.b16 %v426
        %v601 = vunpack.c.l.b16 %v427
        %v602 = vunpack.c.h.b16 %v427
        %v603 = vunpack.c.l.b16 %v428
        %v604 = vunpack.c.h.b16 %v428
        %v605 = vunpack.c.l.b16 %v429
        %v606 = vunpack.c.h.b16 %v429
        %v607 = vunpack.c.l.b16 %v430
        %v608 = vunpack.c.h.b16 %v430
        %v609 = vunpack.c.l.b16 %v431
        %v610 = vunpack.c.h.b16 %v431
        %v611 = vunpack.c.l.b16 %v432
        %v612 = vunpack.c.h.b16 %v432
        %v613 = vunpack.c.l.b16 %v433
        %v614 = vunpack.c.h.b16 %v433
        %v615 = vunpack.c.l.b16 %v434
        %v616 = vunpack.c.h.b16 %v434
        %v617 = vunpack.c.l.b16 %v435
        %v618 = vunpack.c.h.b16 %v435
        %v619 = vunpack.c.l.b16 %v436
        %v620 = vunpack.c.h.b16 %v436
        %v621 = vunpack.c.l.b16 %v437
        %v622 = vunpack.c.h.b16 %v437
        %v623 = vunpack.c.l.b16 %v438
        %v624 = vunpack.c.h.b16 %v438
        %v625 = vunpack.c.l.b16 %v439
        %v626 = vunpack.c.h.b16 %v439
        %v627 = vunpack.c.l.b16 %v440
        %v628 = vunpack.c.h.b16 %v440
        %v629 = vunpack.c.l.b16 %v441
        %v630 = vunpack.c.h.b16 %v441
        %v631 = vunpack.c.l.b16 %v442
        %v632 = vunpack.c.h.b16 %v442
        %v633 = vunpack.c.l.b16 %v443
        %v634 = vunpack.c.h.b16 %v443
        %v635 = vunpack.c.l.b16 %v444
        %v636 = vunpack.c.h.b16 %v444
        %v637 = vunpack.c.l.b16 %v445
        %v638 = vunpack.c.h.b16 %v445
        %v639 = vunpack.c.l.b16 %v446
        %v640 = vunpack.c.h.b16 %v446
        %v641 = vunpack.c.l.b16 %v447
        %v642 = vunpack.c.h.b16 %v447
        %v643 = vunpack.c.l.b16 %v448
        %v644 = vunpack.c.h.b16 %v448
        %v645 = vunpack.c.l.b16 %v449
        %v646 = vunpack.c.h.b16 %v449
        %v647 = vunpack.c.l.b16 %v450
        %v648 = vunpack.c.h.b16 %v450
        %v649 = vunpack.c.l.b16 %v451
        %v650 = vunpack.c.h.b16 %v451
        %v651 = vunpack.c.l.b16 %v452
        %v652 = vunpack.c.h.b16 %v452
        %v653 = vunpack.c.l.b16 %v453
        %v654 = vunpack.c.h.b16 %v453
        %v655 = vunpack.c.l.b16 %v454
        %v656 = vunpack.c.h.b16 %v454
        %v657 = vunpack.c.l.b16 %v455
        %v658 = vunpack.c.h.b16 %v455
        %v659 = vunpack.c.l.b16 %v456
        %v660 = vunpack.c.h.b16 %v456
        %v661 = vunpack.c.l.b16 %v457
        %v662 = vunpack.c.h.b16 %v457
        %v663 = vunpack.c.l.b16 %v458
        %v664 = vunpack.c.h.b16 %v458
        %v665 = vunpack.c.l.b16 %v459
        %v666 = vunpack.c.h.b16 %v459
        %v667 = vunpack.c.l.b16 %v460
        %v668 = vunpack.c.h.b16 %v460
        %v669 = vunpack.c.l.b16 %v461
        %v670 = vunpack.c.h.b16 %v461
        %v671 = vunpack.c.l.b16 %v462
        %v672 = vunpack.c.h.b16 %v462
        %v673 = vunpack.c.l.b16 %v463
        %v674 = vunpack.c.h.b16 %v463
        %v675 = vunpack.c.l.b16 %v464
        %v676 = vunpack.c.h.b16 %v464
        %v677 = vunpack.c.l.b16 %v465
        %v678 = vunpack.c.h.b16 %v465
        %v679 = vunpack.c.l.b16 %v466
        %v680 = vunpack.c.h.b16 %v466
        %v681 = vpack.c.b16 %v557, %v553
        %v682 = vpack.c.b16 %v558, %v554
        %v683 = vpack.c.b16 %v559, %v555
        %v684 = vpack.c.b16 %v560, %v556
        %v685 = vpack.c.b16 %v565, %v561
        %v686 = vpack.c.b16 %v566, %v562
        %v687 = vpack.c.b16 %v567, %v563
        %v688 = vpack.c.b16 %v568, %v564
        %v689 = vpack.c.b16 %v573, %v569
        %v690 = vpack.c.b16 %v574, %v570
        %v691 = vpack.c.b16 %v575, %v571
        %v692 = vpack.c.b16 %v576, %v572
        %v693 = vpack.c.b16 %v581, %v577
        %v694 = vpack.c.b16 %v582, %v578
        %v695 = vpack.c.b16 %v583, %v579
        %v696 = vpack.c.b16 %v584, %v580
        %v697 = vpack.c.b16 %v589, %v585
        %v698 = vpack.c.b16 %v590, %v586
        %v699 = vpack.c.b16 %v591, %v587
        %v700 = vpack.c.b16 %v592, %v588
        %v701 = vpack.c.b16 %v597, %v593
        %v702 = vpack.c.b16 %v598, %v594
        %v703 = vpack.c.b16 %v599, %v595
        %v704 = vpack.c.b16 %v600, %v596
        %v705 = vpack.c.b16 %v605, %v601
        %v706 = vpack.c.b16 %v606, %v602
        %v707 = vpack.c.b16 %v607, %v603
        %v708 = vpack.c.b16 %v608, %v604
        %v709 = vpack.c.b16 %v613, %v609
        %v710 = vpack.c.b16 %v614, %v610
        %v711 = vpack.c.b16 %v615, %v611
        %v712 = vpack.c.b16 %v616, %v612
        %v713 = vpack.c.b16 %v621, %v617
        %v714 = vpack.c.b16 %v622, %v618
        %v715 = vpack.c.b16 %v623, %v619
        %v716 = vpack.c.b16 %v624, %v620
        %v717 = vpack.c.b16 %v629, %v625
        %v718 = vpack.c.b16 %v630, %v626
        %v719 = vpack.c.b16 %v631, %v627
        %v720 = vpack.c.b16 %v632, %v628
        %v721 = vpack.c.b16 %v637, %v633
        %v722 = vpack.c.b16 %v638, %v634
        %v723 = vpack.c.b16 %v639, %v635
        %v724 = vpack.c.b16 %v640, %v636
        %v725 = vpack.c.b16 %v645, %v641
        %v726 = vpack.c.b16 %v646, %v642
        %v727 = vpack.c.b16 %v647, %v643
        %v728 = vpack.c.b16 %v648, %v644
        %v729 = vpack.c.b16 %v653, %v649
        %v730 = vpack.c.b16 %v654, %v650
        %v731 = vpack.c.b16 %v655, %v651
        %v732 = vpack.c.b16 %v656, %v652
        %v733 = vpack.c.b16 %v661, %v657
        %v734 = vpack.c.b16 %v662, %v658
        %v735 = vpack.c.b16 %v663, %v659
        %v736 = vpack.c.b16 %v664, %v660
        %v737 = vpack.c.b16 %v669, %v665
        %v738 = vpack.c.b16 %v670, %v666
        %v739 = vpack.c.b16 %v671, %v667
        %v740 = vpack.c.b16 %v672, %v668
        %v741 = vpack.c.b16 %v677, %v673
        %v742 = vpack.c.b16 %v678, %v674
        %v743 = vpack.c.b16 %v679, %v675
        %v744 = vpack.c.b16 %v680, %v676
        %809 = vmatprep.subr.bf16.mxu0 %v710
        %810 = vmatpush1.bf16.msra.mxu0 %v709
        %811 = vmatprep.subr.bf16.mxu0 %v706
        %812 = vmatpush1.bf16.msra.mxu0 %v705
        %813 = vmatprep.subr.bf16.mxu0 %v702
        %814 = vmatpush1.bf16.msra.mxu0 %v701
        %815 = vmatprep.subr.bf16.mxu0 %v698
        %816 = vmatpush1.bf16.msra.mxu0 %v697
        %817 = vmatprep.subr.bf16.mxu0 %v694
        %818 = vmatpush1.bf16.msra.mxu0 %v693
        %819 = vmatprep.subr.bf16.mxu0 %v690
        %820 = vmatpush1.bf16.msra.mxu0 %v689
        %821 = vmatprep.subr.bf16.mxu0 %v686
        %822 = vmatpush1.bf16.msra.mxu0 %v685
        %823 = vmatprep.subr.bf16.mxu0 %v682
        %824 = vmatpush1.bf16.msra.mxu0 %v681
        %825 = vmatprep.subr.bf16.mxu0 %v742
        %826 = vmatpush2.bf16.msra.mxu0 %v741
        %827 = vmatprep.subr.bf16.mxu0 %v738
        %828 = vmatpush2.bf16.msra.mxu0 %v737
        %829 = vmatprep.subr.bf16.mxu0 %v734
        %830 = vmatpush2.bf16.msra.mxu0 %v733
        %831 = vmatprep.subr.bf16.mxu0 %v730
        %832 = vmatpush2.bf16.msra.mxu0 %v729
        %833 = vmatprep.subr.bf16.mxu0 %v726
        %834 = vmatpush2.bf16.msra.mxu0 %v725
        %835 = vmatprep.subr.bf16.mxu0 %v722
        %836 = vmatpush2.bf16.msra.mxu0 %v721
        %837 = vmatprep.subr.bf16.mxu0 %v718
        %838 = vmatpush2.bf16.msra.mxu0 %v717
        %839 = vmatprep.subr.bf16.mxu0 %v714
        %840 = vmatpush2.bf16.msra.mxu0 %v713
        %841 = vmatprep.mubr.bf16.mxu0 %v402
        %842 = vmatmul.mubr.bf16.gmra.mxu0 %v401
        %v843 = vpop.f32.mrf.mxu0
        %v844 = vadd.f32 %v472, %v843
        %v845 = vpop.f32.mrf.mxu0
        %v846 = vadd.f32 %v476, %v845
        %v847 = vpop.f32.mrf.mxu0
        %v848 = vadd.f32 %v472, %v847
        %v849 = vpop.f32.mrf.mxu0
        %v850 = vadd.f32 %v476, %v849
        %851 = vdwg.mxu0
        %852 = vmatprep.subr.bf16.mxu0 %v712
        %853 = vmatpush1.bf16.msra.mxu0 %v711
        %854 = vmatprep.subr.bf16.mxu0 %v708
        %855 = vmatpush1.bf16.msra.mxu0 %v707
        %856 = vmatprep.subr.bf16.mxu0 %v704
        %857 = vmatpush1.bf16.msra.mxu0 %v703
        %858 = vmatprep.subr.bf16.mxu0 %v700
        %859 = vmatpush1.bf16.msra.mxu0 %v699
        %860 = vmatprep.subr.bf16.mxu0 %v696
        %861 = vmatpush1.bf16.msra.mxu0 %v695
        %862 = vmatprep.subr.bf16.mxu0 %v692
        %863 = vmatpush1.bf16.msra.mxu0 %v691
        %864 = vmatprep.subr.bf16.mxu0 %v688
        %865 = vmatpush1.bf16.msra.mxu0 %v687
        %866 = vmatprep.subr.bf16.mxu0 %v684
        %867 = vmatpush1.bf16.msra.mxu0 %v683
        %868 = vmatprep.subr.bf16.mxu0 %v744
        %869 = vmatpush2.bf16.msra.mxu0 %v743
        %870 = vmatprep.subr.bf16.mxu0 %v740
        %871 = vmatpush2.bf16.msra.mxu0 %v739
        %872 = vmatprep.subr.bf16.mxu0 %v736
        %873 = vmatpush2.bf16.msra.mxu0 %v735
        %874 = vmatprep.subr.bf16.mxu0 %v732
        %875 = vmatpush2.bf16.msra.mxu0 %v731
        %876 = vmatprep.subr.bf16.mxu0 %v728
        %877 = vmatpush2.bf16.msra.mxu0 %v727
        %878 = vmatprep.subr.bf16.mxu0 %v724
        %879 = vmatpush2.bf16.msra.mxu0 %v723
        %880 = vmatprep.subr.bf16.mxu0 %v720
        %881 = vmatpush2.bf16.msra.mxu0 %v719
        %882 = vmatprep.subr.bf16.mxu0 %v716
        %883 = vmatpush2.bf16.msra.mxu0 %v715
        %884 = vmatprep.mubr.bf16.mxu0 %v402
        %885 = vmatmul.mubr.bf16.gmra.mxu0 %v401
        %v886 = vpop.f32.mrf.mxu0
        %v887 = vadd.f32 %v480, %v886
        %v888 = vpop.f32.mrf.mxu0
        %v889 = vadd.f32 %v484, %v888
        %v890 = vpop.f32.mrf.mxu0
        %v891 = vadd.f32 %v480, %v890
        %v892 = vpop.f32.mrf.mxu0
        %v893 = vadd.f32 %v484, %v892
        %894 = vdwg.mxu0
        %v895 = vpack.c.bf16 %v848, %v844
        %v897 = vunpack.c.l.b16 %v895
        %v898 = vunpack.c.h.b16 %v895
        %v899 = vpack.c.b16 %v897, %v897
        %v900 = vpack.c.b16 %v898, %v898
        %903 = vst [vmem:[%s321] sm:$0xf] %v899
        %904 = vst [vmem:[%s321 + $0x4] sm:$0xf] %v900
        %v905 = vpack.c.bf16 %v891, %v887
        %v907 = vunpack.c.l.b16 %v905
        %v908 = vunpack.c.h.b16 %v905
        %v909 = vpack.c.b16 %v907, %v907
        %v910 = vpack.c.b16 %v908, %v908
        %913 = vst [vmem:[%s328] sm:$0xf] %v909
        %914 = vst [vmem:[%s328 + $0x4] sm:$0xf] %v910
        %v915 = vpack.c.bf16 %v850, %v846
        %v917 = vunpack.c.l.b16 %v915
        %v918 = vunpack.c.h.b16 %v915
        %v919 = vpack.c.b16 %v917, %v917
        %v920 = vpack.c.b16 %v918, %v918
        %s923 = scalar_lea.vmem %s321, 8 [#allocation8]
        %924 = vst [vmem:[%s923] sm:$0xf] %v919
        %925 = vst [vmem:[%s923 + $0x4] sm:$0xf] %v920
        %v926 = vpack.c.bf16 %v893, %v889
        %v928 = vunpack.c.l.b16 %v926
        %v929 = vunpack.c.h.b16 %v926
        %v930 = vpack.c.b16 %v928, %v928
        %v931 = vpack.c.b16 %v929, %v929
        %s934 = scalar_lea.vmem %s328, 8 [#allocation9]
        %935 = vst [vmem:[%s934] sm:$0xf] %v930
        %936 = vst [vmem:[%s934 + $0x4] sm:$0xf] %v931
        %s937 = sand.u32 %s162, 1
        %s938 = scalar_lea.sflag [#allocation4], %s937
        %s939 = sand.u32 %s162, 1
        %s940 = smul.addr %s939, 16
        %s941 = scalar_lea.vmem [#allocation8], %s940
        %s942 = sand.u32 %s190, 1
        %s943 = scalar_lea.sflag [#allocation10], %s942
        %s944 = sand.u32 %s190, 1
        %s945 = smul.addr %s944, 16
        %s946 = scalar_lea.vmem [#allocation9], %s945
        // Predicated region
        $region53: #{tpu_custom_call.1} parent=39 // pred_check
          %p947 = pneg %p172
        $region54: #{tpu_custom_call.1} parent=39 // pred_check_branch
          %949 = sbr.rel (%p947) target = $region56
        $region55: #{tpu_custom_call.1} parent=39 // pred_region
          %s950 = smul.u32 2, %s33
          %s952 = ssub.s32 256, 256
          %953 = vsyncadd %s938, %s952
          %s954 = smul.addr %s32, 4
          %s955 = sadd.s32 %s950, %s954
          %s956 = smul.addr %s955, 64
          %s957 = scalar_lea.hbm %s5, %s956
          %s958 = sshll.u32 %s941, 4
          %s959 = int_to_ptr.vmem [resolvable:$true] %s958
          %964 = dma.vmem_to_hbm [thread:$0]  %s959, 256, %s957, %s938, 64, 64, 4
        $region56: #{tpu_custom_call.1} parent=39 // pred_fallthru
          _
        // Predicated region
        $region57: #{tpu_custom_call.1} parent=39 // pred_check
          %p965 = pneg %p200
        $region58: #{tpu_custom_call.1} parent=39 // pred_check_branch
          %967 = sbr.rel (%p965) target = $region60
        $region59: #{tpu_custom_call.1} parent=39 // pred_region
          %s968 = smul.u32 2, %s33
          %s970 = ssub.s32 256, 256
          %971 = vsyncadd %s943, %s970
          %s972 = smul.addr %s32, 4
          %s973 = sadd.s32 %s968, %s972
          %s974 = smul.addr %s973, 64
          %s975 = scalar_lea.hbm %s6, %s974
          %s976 = sshll.u32 %s946, 4
          %s977 = int_to_ptr.vmem [resolvable:$true] %s976
          %982 = dma.vmem_to_hbm [thread:$0]  %s977, 256, %s975, %s943, 64, 64, 4
        $region60: #{tpu_custom_call.1} parent=39 // pred_fallthru
          _
      $region40: #{tpu_custom_call.1} parent=5 // pred_fallthru
        _
      %p983 = scmp.le.s32.totalorder 2, %s23
      // Predicated region
      $region61: #{tpu_custom_call.1} parent=5 // pred_check
        %p984 = pneg %p983
      $region62: #{tpu_custom_call.1} parent=5 // pred_check_branch
        %986 = sbr.rel (%p984) target = $region64
      $region63: #{tpu_custom_call.1} parent=5 // pred_region
        %s987 = ssub.s32 %s23, 2
        // Predicated region
        $region65: #{tpu_custom_call.1} parent=63 // pred_check
          %p988 = pneg %p178
        $region66: #{tpu_custom_call.1} parent=63 // pred_check_branch
          %990 = sbr.rel (%p988) target = $region68
        $region67: #{tpu_custom_call.1} parent=63 // pred_region
          %s991 = sand.u32 %s163, 1
          %s992 = scalar_lea.sflag [#allocation4], %s991
          %s993 = sand.u32 %s163, 1
          %s994 = smul.addr %s993, 16
          %s995 = scalar_lea.vmem [#allocation8], %s994
          %996 = dma.done %s992, 256
        $region68: #{tpu_custom_call.1} parent=63 // pred_fallthru
          _
        // Predicated region
        $region69: #{tpu_custom_call.1} parent=63 // pred_check
          %p997 = pneg %p206
        $region70: #{tpu_custom_call.1} parent=63 // pred_check_branch
          %999 = sbr.rel (%p997) target = $region72
        $region71: #{tpu_custom_call.1} parent=63 // pred_region
          %s1000 = sand.u32 %s191, 1
          %s1001 = scalar_lea.sflag [#allocation10], %s1000
          %s1002 = sand.u32 %s191, 1
          %s1003 = smul.addr %s1002, 16
          %s1004 = scalar_lea.vmem [#allocation9], %s1003
          %1005 = dma.done %s1001, 256
        $region72: #{tpu_custom_call.1} parent=63 // pred_fallthru
          _
      $region64: #{tpu_custom_call.1} parent=5 // pred_fallthru
        _
    $region6: #{tpu_custom_call.1} parent=1 // loop_footer
      %s27 = sadd.s32 1, %s23
    $region7: #{tpu_custom_call.1} parent=1 // loop_footer_branch
      %22 = sbr.rel target = $region3
    $region8: #{tpu_custom_call.1} parent=1 // loop_exit
      _
    %1006 = vsyncpa [#allocation3], 1
    %s1007 = scalar_lea.sflag [#allocation3], 1
    %1008 = vsyncpa %s1007, 1
    %1009 = vsyncpa [#allocation6], 1
    %1010 = vsyncpa [#allocation4], 1
    %s1011 = scalar_lea.sflag [#allocation4], 1
    %1012 = vsyncpa %s1011, 1
    %1013 = vsyncpa [#allocation10], 1
    %s1014 = scalar_lea.sflag [#allocation10], 1
    %1015 = vsyncpa %s1014, 1

</llo_original>
